<compile_context>
chip_gen: v7x
topology: tpu7x:2x2x1
jax: 0.10.0
libtpu: 0.0.40
codegen_flags: <defaults>
</compile_context>

<pallas_src>
import math
from functools import partial

import jax
import jax.numpy as jnp
from jax.experimental import pallas as pl
from jax.experimental.pallas import tpu as pltpu


def _round_up(x, m):
    return ((x + m - 1) // m) * m


def _largest_divisor_leq(n, cap):
    cap = int(max(1, min(n, cap)))
    for d in range(cap, 0, -1):
        if n % d == 0:
            return d
    return 1


def _choose_tiles(B, L):
    """Fixed, (8,128)-legal tiles with bounded per-step VMEM."""
    # 256 query rows per tile works on all generations (multiple of 128 for
    # v5e, MXU-native 256 for v6e/v7x); short sequences use one padded tile.
    TL = 256 if L > 256 else _round_up(L, 8)
    L_pad = _round_up(L, TL)
    # Pack batches so each step sees ~256 query rows, but keep >= 2 grid steps
    # on the "parallel" batch axis when B allows (v7x has 2 TensorCores).
    tb_cap = max(1, 256 // TL)
    if B >= 2:
        tb_cap = min(tb_cap, B // 2)
    TB = _largest_divisor_leq(B, tb_cap)
    return TB, TL, L_pad


# ----------------------------- Pallas kernel --------------------------------
def _mha_kernel(q_ref, k_ref, v_ref,
                wq_ref, wk_ref, wv_ref, wo_ref,
                bq_ref, bk_ref, bv_ref, bo_ref,
                *out_and_scratch, nhead, head_dim, s_valid, need_weights):
    if need_weights:
        out_ref, attn_ref, kp_sc, vp_sc, ctx_sc = out_and_scratch
    else:
        out_ref, kp_sc, vp_sc, ctx_sc = out_and_scratch
        attn_ref = None

    f32, bf16 = jnp.float32, jnp.bfloat16
    TB, TL, E = q_ref.shape
    S = k_ref.shape[1]                      # padded S (multiple of 128)

    # ---- K/V projections: once per batch block (l == 0), kept in VMEM scratch
    #      so they are NOT recomputed for every query-row tile.
    @pl.when(pl.program_id(1) == 0)
    def _():
        k2 = k_ref[...].reshape(TB * S, E).astype(bf16)
        v2 = v_ref[...].reshape(TB * S, E).astype(bf16)
        kp_sc[...] = (jnp.dot(k2, wk_ref[...], preferred_element_type=f32)
                      + bk_ref[...]).astype(bf16).reshape(TB, S, E)
        vp_sc[...] = (jnp.dot(v2, wv_ref[...], preferred_element_type=f32)
                      + bv_ref[...]).astype(bf16).reshape(TB, S, E)

    # ---- Q projection for this l tile (1/sqrt(head_dim) pre-folded into wq/bq)
    q2 = q_ref[...].reshape(TB * TL, E).astype(bf16)
    qp = (jnp.dot(q2, wq_ref[...], preferred_element_type=f32)
          + bq_ref[...]).astype(bf16).reshape(TB, TL, E)
    kp = kp_sc[...]
    vp = vp_sc[...]

    # Additive bias masking the padded key columns (hoisted out of the loop).
    if s_valid < S:
        col = jax.lax.broadcasted_iota(jnp.int32, (1, 1, S), 2)
        mask_bias = jnp.where(col < s_valid, 0.0, -1e30).astype(f32)
    else:
        mask_bias = None

    # Static (fully unrolled) head loop: head_dim is static, so the lane slices
    # are free; a fori_loop would force dynamic lane slicing for head_dim < 128.
    # Per-head temporaries die each iteration because results go straight into
    # VMEM (ctx_sc / attn_ref) instead of growing live f32 accumulators.
    for h in range(nhead):
        lo = h * head_dim
        qh = qp[:, :, lo:lo + head_dim]               # (TB, TL, hd)
        kh = kp[:, :, lo:lo + head_dim]               # (TB, S,  hd)
        vh = vp[:, :, lo:lo + head_dim]               # (TB, S,  hd)

        # Batched NT dot_general over the packed batch dim (no K transpose).
        s = jnp.einsum('bld,bsd->bls', qh, kh,
                       preferred_element_type=f32)    # (TB, TL, S)
        if mask_bias is not None:
            s = s + mask_bias
        s = s - jnp.max(s, axis=-1, keepdims=True)
        e = jnp.exp(s)
        p = e * pl.reciprocal(jnp.sum(e, axis=-1, keepdims=True), approx=True)

        if need_weights:
            if h == 0:
                attn_ref[...] = p                     # accumulate in-place
            else:
                attn_ref[...] += p

        ctx = jnp.einsum('bls,bsd->bld', p.astype(bf16), vh,
                         preferred_element_type=f32)  # (TB, TL, hd)
        ctx_sc[:, lo:lo + head_dim] = (
            ctx.reshape(TB * TL, head_dim).astype(bf16))

    if need_weights:
        attn_ref[...] = attn_ref[...] * (1.0 / nhead)

    # ---- Output projection: a single full-width matmul against un-split Wo.
    out = (jnp.dot(ctx_sc[...], wo_ref[...], preferred_element_type=f32)
           + bo_ref[...])
    out_ref[...] = out.reshape(TB, TL, E).astype(out_ref.dtype)


# --------------------------- pallas_call wrapper -----------------------------
def pallas_mha(q, k, v, wq, wk, wv, wo, bq, bk, bv, bo, *,
               nhead, need_weights=True):
    """q: (B, L, E); k, v: (B, S, E).
    wq/wk/wv/wo: (E, E) bf16 pre-transposed (y = x @ W); biases: (1, E) f32
    (wq/bq already scaled by 1/sqrt(head_dim))."""
    B, L, E = q.shape
    S = k.shape[1]
    head_dim = E // nhead

    TB, TL, L_pad = _choose_tiles(B, L)
    S_pad = _round_up(S, 128)               # lane-dense attn / softmax vregs
    if L_pad != L:
        q = jnp.pad(q, ((0, 0), (0, L_pad - L), (0, 0)))
    if S_pad != S:
        k = jnp.pad(k, ((0, 0), (0, S_pad - S), (0, 0)))
        v = jnp.pad(v, ((0, 0), (0, S_pad - S), (0, 0)))
    grid = (B // TB, L_pad // TL)

    # TODO(synk): for very long S on v7x (64 MiB VMEM) the full-S K/V blocks
    #             should move to an S-tiled flash-style grid axis with online
    #             softmax instead of whole-S scratch.
    kernel = partial(_mha_kernel, nhead=nhead, head_dim=head_dim,
                     s_valid=S, need_weights=need_weights)

    # Grid-invariant weights / biases: whole-array single-buffered VMEM operands
    # (no double-buffered copies of the (E,E) weights).
    vmem_full = pl.BlockSpec(memory_space=pltpu.MemorySpace.VMEM)
    in_specs = [
        pl.BlockSpec((TB, TL, E), lambda b, l: (b, l, 0)),       # q tile
        pl.BlockSpec((TB, S_pad, E), lambda b, l: (b, 0, 0)),    # k (full S)
        pl.BlockSpec((TB, S_pad, E), lambda b, l: (b, 0, 0)),    # v (full S)
        vmem_full, vmem_full, vmem_full, vmem_full,              # wq wk wv wo
        vmem_full, vmem_full, vmem_full, vmem_full,              # bq bk bv bo
    ]
    out_spec_o = pl.BlockSpec((TB, TL, E), lambda b, l: (b, l, 0))
    if need_weights:
        out_shape = (jax.ShapeDtypeStruct((B, L_pad, E), q.dtype),
                     jax.ShapeDtypeStruct((B, L_pad, S_pad), jnp.float32))
        out_specs = (out_spec_o,
                     pl.BlockSpec((TB, TL, S_pad), lambda b, l: (b, l, 0)))
    else:
        out_shape = jax.ShapeDtypeStruct((B, L_pad, E), q.dtype)
        out_specs = out_spec_o

    scratch_shapes = [
        pltpu.VMEM((TB, S_pad, E), jnp.bfloat16),    # projected K (per b block)
        pltpu.VMEM((TB, S_pad, E), jnp.bfloat16),    # projected V (per b block)
        pltpu.VMEM((TB * TL, E), jnp.bfloat16),      # per-head context slab
    ]

    # Explicit VMEM budget: resident bf16 weights + double-buffered tiles +
    # scratch + rough in-kernel f32 temporaries; clamped to 64 MiB (v7x).
    itm = q.dtype.itemsize
    need = (
        4 * E * E * 2 + 4 * E * 4                                     # weights
        + 2 * TB * TL * E * itm                                       # q tiles
        + 2 * 2 * TB * S_pad * E * itm                                # k/v tiles
        + 2 * TB * TL * E * itm                                       # out tiles
        + (2 * TB * TL * S_pad * 4 if need_weights else 0)            # attn tiles
        + 2 * TB * S_pad * E * 2 + TB * TL * E * 2                    # scratch
        + TB * TL * (3 * S_pad + 2 * E) * 4 + 2 * TB * S_pad * E * 4  # temporaries
    )
    vmem_limit = int(min(max(need * 5 // 4, 32 * 1024 * 1024),
                         64 * 1024 * 1024))

    res = pl.pallas_call(
        kernel,
        out_shape=out_shape,
        grid=grid,
        in_specs=in_specs,
        out_specs=out_specs,
        scratch_shapes=scratch_shapes,
        compiler_params=pltpu.CompilerParams(
            dimension_semantics=("parallel", "arbitrary"),
            vmem_limit_bytes=vmem_limit),
    )(q, k, v, wq, wk, wv, wo, bq, bk, bv, bo)

    if need_weights:
        out, attn = res
        return out[:, :L, :], attn[:, :L, :S]
    return res[:, :L, :], None


# ----------------------------- Module wrapper --------------------------------
class MultiheadAttentionPallas:
    """JAX/Pallas equivalent of the PyTorch MultiheadAttention wrapper."""
    # TODO(synk): attn_mask / key_padding_mask / add_bias_kv / add_zero_attn /
    #             dropout>0 paths not implemented (module defaults exercised).

    def __init__(self, nhead, dropout=0.0, nb=1):
        assert dropout == 0.0, "dropout on attn weights not implemented (default 0.0)"
        self.nhead = nhead
        self.nb = nb
        self.params = None

    def init_params(self, first_input, rng):
        if first_input.ndim == 4:                    # mirror the PyTorch wrapper
            first_input = first_input.reshape(
                first_input.shape[0], first_input.shape[1], -1)
        e_full = first_input.shape[-1]
        self.embed_dim = e_full // self.nb           # per-split embed dim
        E = self.embed_dim
        nhead_eff = self.nhead // self.nb
        hd = E // nhead_eff
        assert nhead_eff * hd == E
        self.nhead_eff, self.head_dim = nhead_eff, hd

        keys = jax.random.split(rng, 8)
        s_in = 1.0 / math.sqrt(E)
        # canonical f32 params; weights pre-transposed: y = x @ W + b.
        self.params = dict(
            wq=jax.random.normal(keys[0], (E, E), jnp.float32) * s_in,
            wk=jax.random.normal(keys[1], (E, E), jnp.float32) * s_in,
            wv=jax.random.normal(keys[2], (E, E), jnp.float32) * s_in,
            wo=jax.random.normal(keys[3], (E, E), jnp.float32) * s_in,
            bq=jax.random.normal(keys[4], (1, E), jnp.float32) * 0.02,
            bk=jax.random.normal(keys[5], (1, E), jnp.float32) * 0.02,
            bv=jax.random.normal(keys[6], (1, E), jnp.float32) * 0.02,
            bo=jax.random.normal(keys[7], (1, E), jnp.float32) * 0.02,
        )
        # Kernel-side operands: bf16 weights (2x MXU rate, half the resident
        # VMEM), 1/sqrt(hd) folded into the Q projection; Wo kept un-split so
        # the output projection is one full contraction-width matmul.
        p, scale = self.params, 1.0 / math.sqrt(hd)
        self.kernel_params = dict(
            wq=(p["wq"] * scale).astype(jnp.bfloat16),
            wk=p["wk"].astype(jnp.bfloat16),
            wv=p["wv"].astype(jnp.bfloat16),
            wo=p["wo"].astype(jnp.bfloat16),
            bq=p["bq"] * scale,
            bk=p["bk"], bv=p["bv"], bo=p["bo"],
        )
        # TODO(synk): fuse Wq|Wk|Wv into one (E,3E) projection when query is
        #             key is value (self-attention); fp8 weights on v7x.

    def __call__(self, query, key, value, need_weights=True):
        # query: (N, L, E_full); key/value: (N, S, E_full)  [batch-first, as the
        # PyTorch forward permutes (1,0,2) before nn.MultiheadAttention].
        N, L, e_full = query.shape
        S = key.shape[1]
        nb, E = self.nb, self.embed_dim

        def split_nb(x, T):
            x = jnp.transpose(x, (1, 0, 2))          # (T, N, E_full)
            x = x.reshape(T, N * nb, E)              # (T, N*nb, E)
            return jnp.transpose(x, (1, 0, 2))       # (N*nb, T, E)

        qb, kb, vb = split_nb(query, L), split_nb(key, S), split_nb(value, S)
        kp = self.kernel_params
        out, attn = pallas_mha(qb, kb, vb,
                               kp["wq"], kp["wk"], kp["wv"], kp["wo"],
                               kp["bq"], kp["bk"], kp["bv"], kp["bo"],
                               nhead=self.nhead_eff, need_weights=need_weights)
        # merge nb splits back: (N*nb, L, E) -> (N, L, E_full)
        out = jnp.transpose(out, (1, 0, 2)).reshape(L, N, e_full)
        out = jnp.transpose(out, (1, 0, 2))
        return out, attn                             # attn: (N*nb, L, S) or None


# ----------------------------- Pure-JAX reference -----------------------------
def _reference_mha(q, k, v, p, nhead):
    B, L, E = q.shape
    S = k.shape[1]
    hd = E // nhead
    qp = q @ p["wq"] + p["bq"]
    kp = k @ p["wk"] + p["bk"]
    vp = v @ p["wv"] + p["bv"]
    qh = qp.reshape(B, L, nhead, hd).transpose(0, 2, 1, 3)
    kh = kp.reshape(B, S, nhead, hd).transpose(0, 2, 1, 3)
    vh = vp.reshape(B, S, nhead, hd).transpose(0, 2, 1, 3)
    s = jnp.einsum("bhld,bhsd->bhls", qh, kh) / math.sqrt(hd)
    pw = jax.nn.softmax(s, axis=-1)
    ctx = jnp.einsum("bhls,bhsd->bhld", pw, vh).transpose(0, 2, 1, 3).reshape(B, L, E)
    out = ctx @ p["wo"] + p["bo"]
    return out, pw.mean(axis=1)


# --------------------------------- main ---------------------------------------
if __name__ == "__main__":
    N, L, S, E_FULL, NHEAD, NB = 2, 8, 8, 32, 4, 1

    rng = jax.random.PRNGKey(0)
    kq, kk, kv, kparam = jax.random.split(rng, 4)
    query = jax.random.normal(kq, (N, L, E_FULL), jnp.float32)
    key = jax.random.normal(kk, (N, S, E_FULL), jnp.float32)
    value = jax.random.normal(kv, (N, S, E_FULL), jnp.float32)

    mha = MultiheadAttentionPallas(nhead=NHEAD, nb=NB)
    mha.init_params(key, kparam)

    out, attn = mha(query, key, value)
    out = jax.block_until_ready(out)
    attn = jax.block_until_ready(attn)

    # Sanity check against a pure-JAX f32 reference.  The kernel does its
    # matmuls in bf16 (f32 accumulation) on the MXU and normalizes softmax with
    # an approximate EUP reciprocal, so tolerances are bf16-level.
    ref_out, ref_attn = _reference_mha(query, key, value, mha.params, NHEAD // NB)
    assert out.shape == (N, L, E_FULL)
    assert attn.shape == (N * NB, L, S)
    assert jnp.allclose(out, ref_out, atol=5e-2, rtol=5e-2)
    assert jnp.allclose(attn, ref_attn, atol=5e-2, rtol=5e-2)

    print("KERNEL_OK")
</pallas_src>

<mosaic_0001>
module attributes {stable_mosaic.version = 11 : i64} {
  func.func @_mha_kernel(%arg0: i32, %arg1: i32, %arg2: memref<1x8x32xf32, #tpu.memory_space<vmem>>, %arg3: memref<1x128x32xf32, #tpu.memory_space<vmem>>, %arg4: memref<1x128x32xf32, #tpu.memory_space<vmem>>, %arg5: memref<32x32xbf16, #tpu.memory_space<vmem>>, %arg6: memref<32x32xbf16, #tpu.memory_space<vmem>>, %arg7: memref<32x32xbf16, #tpu.memory_space<vmem>>, %arg8: memref<32x32xbf16, #tpu.memory_space<vmem>>, %arg9: memref<1x32xf32, #tpu.memory_space<vmem>>, %arg10: memref<1x32xf32, #tpu.memory_space<vmem>>, %arg11: memref<1x32xf32, #tpu.memory_space<vmem>>, %arg12: memref<1x32xf32, #tpu.memory_space<vmem>>, %arg13: memref<1x8x32xf32, #tpu.memory_space<vmem>>, %arg14: memref<1x8x128xf32, #tpu.memory_space<vmem>>, %arg15: memref<1x128x32xbf16, #tpu.memory_space<vmem>>, %arg16: memref<1x128x32xbf16, #tpu.memory_space<vmem>>, %arg17: memref<8x32xbf16, #tpu.memory_space<vmem>>) attributes {dimension_semantics = [#tpu.dimension_semantics<parallel>, #tpu.dimension_semantics<arbitrary>], iteration_bounds = array<i64: 2, 1>, scalar_prefetch = 0 : i64, scratch_operands = 3 : i64, tpu.core_type = #tpu.core_type<tc>, window_params = [{transform_indices = @transform_0, window_bounds = array<i64: 1, 8, 32>}, {transform_indices = @transform_1, window_bounds = array<i64: 1, 128, 32>}, {transform_indices = @transform_2, window_bounds = array<i64: 1, 128, 32>}, {pipeline_mode = #tpu.pipeline_mode<synchronous>, transform_indices = @transform_3, window_bounds = array<i64: 32, 32>}, {pipeline_mode = #tpu.pipeline_mode<synchronous>, transform_indices = @transform_4, window_bounds = array<i64: 32, 32>}, {pipeline_mode = #tpu.pipeline_mode<synchronous>, transform_indices = @transform_5, window_bounds = array<i64: 32, 32>}, {pipeline_mode = #tpu.pipeline_mode<synchronous>, transform_indices = @transform_6, window_bounds = array<i64: 32, 32>}, {pipeline_mode = #tpu.pipeline_mode<synchronous>, transform_indices = @transform_7, window_bounds = array<i64: 1, 32>}, {pipeline_mode = #tpu.pipeline_mode<synchronous>, transform_indices = @transform_8, window_bounds = array<i64: 1, 32>}, {pipeline_mode = #tpu.pipeline_mode<synchronous>, transform_indices = @transform_9, window_bounds = array<i64: 1, 32>}, {pipeline_mode = #tpu.pipeline_mode<synchronous>, transform_indices = @transform_10, window_bounds = array<i64: 1, 32>}, {transform_indices = @transform_11, window_bounds = array<i64: 1, 8, 32>}, {transform_indices = @transform_12, window_bounds = array<i64: 1, 8, 128>}]} {
    %c0_i32 = arith.constant 0 : i32
    %0 = arith.cmpi eq, %arg1, %c0_i32 : i32
    %1 = arith.extui %0 : i1 to i32
    %c0_i32_0 = arith.constant 0 : i32
    %2 = arith.cmpi ne, %1, %c0_i32_0 : i32
    scf.if %2 {
      %c0_74 = arith.constant 0 : index
      %c0_75 = arith.constant 0 : index
      %c0_76 = arith.constant 0 : index
      %127 = vector.load %arg3[%c0_74, %c0_75, %c0_76] : memref<1x128x32xf32, #tpu.memory_space<vmem>>, vector<1x128x32xf32>
      %128 = vector.shape_cast %127 : vector<1x128x32xf32> to vector<128x32xf32>
      %129 = arith.truncf %128 : vector<128x32xf32> to vector<128x32xbf16>
      %c0_77 = arith.constant 0 : index
      %c0_78 = arith.constant 0 : index
      %c0_79 = arith.constant 0 : index
      %130 = vector.load %arg4[%c0_77, %c0_78, %c0_79] : memref<1x128x32xf32, #tpu.memory_space<vmem>>, vector<1x128x32xf32>
      %131 = vector.shape_cast %130 : vector<1x128x32xf32> to vector<128x32xf32>
      %132 = arith.truncf %131 : vector<128x32xf32> to vector<128x32xbf16>
      %c0_80 = arith.constant 0 : index
      %c0_81 = arith.constant 0 : index
      %133 = vector.load %arg6[%c0_80, %c0_81] : memref<32x32xbf16, #tpu.memory_space<vmem>>, vector<32x32xbf16>
      %cst_82 = arith.constant dense<0.000000e+00> : vector<128x32xf32>
      %134 = tpu.matmul %129, %133, %cst_82 {dimension_numbers = #tpu.dot_dimension_numbers<[1], [0], [0], [1], [0, 0, 1, 1], [], []>} : vector<128x32xbf16>, vector<32x32xbf16>, vector<128x32xf32> -> vector<128x32xf32>
      %c0_83 = arith.constant 0 : index
      %c0_84 = arith.constant 0 : index
      %135 = vector.load %arg10[%c0_83, %c0_84] : memref<1x32xf32, #tpu.memory_space<vmem>>, vector<1x32xf32>
      %136 = vector.broadcast %135 : vector<1x32xf32> to vector<128x32xf32>
      %137 = arith.addf %134, %136 : vector<128x32xf32>
      %138 = arith.truncf %137 : vector<128x32xf32> to vector<128x32xbf16>
      %139 = vector.shape_cast %138 : vector<128x32xbf16> to vector<1x128x32xbf16>
      %c0_85 = arith.constant 0 : index
      %c0_86 = arith.constant 0 : index
      %c0_87 = arith.constant 0 : index
      %140 = vector.load %arg15[%c0_85, %c0_86, %c0_87] : memref<1x128x32xbf16, #tpu.memory_space<vmem>>, vector<1x128x32xbf16>
      tpu.vector_store %arg15[%c0_85, %c0_86, %c0_87], %139 {strides = array<i32>} : memref<1x128x32xbf16, #tpu.memory_space<vmem>>, vector<1x128x32xbf16>,
      %c0_88 = arith.constant 0 : index
      %c0_89 = arith.constant 0 : index
      %141 = vector.load %arg7[%c0_88, %c0_89] : memref<32x32xbf16, #tpu.memory_space<vmem>>, vector<32x32xbf16>
      %cst_90 = arith.constant dense<0.000000e+00> : vector<128x32xf32>
      %142 = tpu.matmul %132, %141, %cst_90 {dimension_numbers = #tpu.dot_dimension_numbers<[1], [0], [0], [1], [0, 0, 1, 1], [], []>} : vector<128x32xbf16>, vector<32x32xbf16>, vector<128x32xf32> -> vector<128x32xf32>
      %c0_91 = arith.constant 0 : index
      %c0_92 = arith.constant 0 : index
      %143 = vector.load %arg11[%c0_91, %c0_92] : memref<1x32xf32, #tpu.memory_space<vmem>>, vector<1x32xf32>
      %144 = vector.broadcast %143 : vector<1x32xf32> to vector<128x32xf32>
      %145 = arith.addf %142, %144 : vector<128x32xf32>
      %146 = arith.truncf %145 : vector<128x32xf32> to vector<128x32xbf16>
      %147 = vector.shape_cast %146 : vector<128x32xbf16> to vector<1x128x32xbf16>
      %c0_93 = arith.constant 0 : index
      %c0_94 = arith.constant 0 : index
      %c0_95 = arith.constant 0 : index
      %148 = vector.load %arg16[%c0_93, %c0_94, %c0_95] : memref<1x128x32xbf16, #tpu.memory_space<vmem>>, vector<1x128x32xbf16>
      tpu.vector_store %arg16[%c0_93, %c0_94, %c0_95], %147 {strides = array<i32>} : memref<1x128x32xbf16, #tpu.memory_space<vmem>>, vector<1x128x32xbf16>,
    } else {
    }
    %c0 = arith.constant 0 : index
    %c0_1 = arith.constant 0 : index
    %c0_2 = arith.constant 0 : index
    %3 = vector.load %arg2[%c0, %c0_1, %c0_2] : memref<1x8x32xf32, #tpu.memory_space<vmem>>, vector<1x8x32xf32>
    %4 = vector.shape_cast %3 : vector<1x8x32xf32> to vector<8x32xf32>
    %5 = arith.truncf %4 : vector<8x32xf32> to vector<8x32xbf16>
    %c0_3 = arith.constant 0 : index
    %c0_4 = arith.constant 0 : index
    %6 = vector.load %arg5[%c0_3, %c0_4] : memref<32x32xbf16, #tpu.memory_space<vmem>>, vector<32x32xbf16>
    %cst = arith.constant dense<0.000000e+00> : vector<8x32xf32>
    %7 = tpu.matmul %5, %6, %cst {dimension_numbers = #tpu.dot_dimension_numbers<[1], [0], [0], [1], [0, 0, 1, 1], [], []>} : vector<8x32xbf16>, vector<32x32xbf16>, vector<8x32xf32> -> vector<8x32xf32>
    %c0_5 = arith.constant 0 : index
    %c0_6 = arith.constant 0 : index
    %8 = vector.load %arg9[%c0_5, %c0_6] : memref<1x32xf32, #tpu.memory_space<vmem>>, vector<1x32xf32>
    %9 = vector.broadcast %8 : vector<1x32xf32> to vector<8x32xf32>
    %10 = arith.addf %7, %9 : vector<8x32xf32>
    %11 = arith.truncf %10 : vector<8x32xf32> to vector<8x32xbf16>
    %12 = vector.shape_cast %11 : vector<8x32xbf16> to vector<1x8x32xbf16>
    %c0_7 = arith.constant 0 : index
    %c0_8 = arith.constant 0 : index
    %c0_9 = arith.constant 0 : index
    %13 = vector.load %arg15[%c0_7, %c0_8, %c0_9] : memref<1x128x32xbf16, #tpu.memory_space<vmem>>, vector<1x128x32xbf16>
    %c0_10 = arith.constant 0 : index
    %c0_11 = arith.constant 0 : index
    %c0_12 = arith.constant 0 : index
    %14 = vector.load %arg16[%c0_10, %c0_11, %c0_12] : memref<1x128x32xbf16, #tpu.memory_space<vmem>>, vector<1x128x32xbf16>
    %15 = tpu.iota {dimensions = array<i32: 2>} : vector<1x1x128xi32>
    %c8_i32 = arith.constant 8 : i32
    %16 = vector.broadcast %c8_i32 : i32 to vector<1x1x128xi32>
    %17 = arith.cmpi slt, %15, %16 : vector<1x1x128xi32>
    %cst_13 = arith.constant 0.000000e+00 : f32
    %cst_14 = arith.constant -1.000000e+30 : f32
    %18 = vector.broadcast %cst_13 : f32 to vector<1x1x128xf32>
    %19 = vector.broadcast %cst_14 : f32 to vector<1x1x128xf32>
    %20 = arith.select %17, %18, %19 : vector<1x1x128xi1>, vector<1x1x128xf32>
    %21 = vector.extract_strided_slice %12 {offsets = [0, 0, 0], sizes = [1, 8, 8], strides = [1, 1, 1]} : vector<1x8x32xbf16> to vector<1x8x8xbf16>
    %22 = vector.extract_strided_slice %13 {offsets = [0, 0, 0], sizes = [1, 128, 8], strides = [1, 1, 1]} : vector<1x128x32xbf16> to vector<1x128x8xbf16>
    %23 = vector.extract_strided_slice %14 {offsets = [0, 0, 0], sizes = [1, 128, 8], strides = [1, 1, 1]} : vector<1x128x32xbf16> to vector<1x128x8xbf16>
    "tpu.trace_start"() <{level = 10 : i32, message = "bld,bsd->bls"}> : () -> ()
    %cst_15 = arith.constant dense<0.000000e+00> : vector<1x8x128xf32>
    %24 = tpu.matmul %21, %22, %cst_15 {dimension_numbers = #tpu.dot_dimension_numbers<[2], [2], [1], [1], [0, 0, 0, 1, 1, 1], [0], [0]>} : vector<1x8x8xbf16>, vector<1x128x8xbf16>, vector<1x8x128xf32> -> vector<1x8x128xf32>
    "tpu.trace_stop"() : () -> ()
    %25 = vector.broadcast %20 : vector<1x1x128xf32> to vector<1x8x128xf32>
    %26 = arith.addf %24, %25 : vector<1x8x128xf32>
    %cst_16 = arith.constant dense<0xFF800000> : vector<1x8xf32>
    %27 = vector.multi_reduction <maximumf>, %26, %cst_16 [2] : vector<1x8x128xf32> to vector<1x8xf32>
    %28 = vector.shape_cast %27 : vector<1x8xf32> to vector<1x8x1xf32>
    %29 = vector.broadcast %28 : vector<1x8x1xf32> to vector<1x8x128xf32>
    %30 = arith.subf %26, %29 : vector<1x8x128xf32>
    %31 = math.exp %30 : vector<1x8x128xf32>
    %cst_17 = arith.constant dense<0.000000e+00> : vector<1x8xf32>
    %32 = vector.multi_reduction <add>, %31, %cst_17 [2] : vector<1x8x128xf32> to vector<1x8xf32>
    %33 = vector.shape_cast %32 : vector<1x8xf32> to vector<1x8x1xf32>
    %34 = tpu.reciprocal %33 {approx = true} : vector<1x8x1xf32> -> vector<1x8x1xf32>
    %35 = vector.broadcast %34 : vector<1x8x1xf32> to vector<1x8x128xf32>
    %36 = arith.mulf %31, %35 : vector<1x8x128xf32>
    %c0_18 = arith.constant 0 : index
    %c0_19 = arith.constant 0 : index
    %c0_20 = arith.constant 0 : index
    %37 = vector.load %arg14[%c0_18, %c0_19, %c0_20] : memref<1x8x128xf32, #tpu.memory_space<vmem>>, vector<1x8x128xf32>
    tpu.vector_store %arg14[%c0_18, %c0_19, %c0_20], %36 {strides = array<i32>} : memref<1x8x128xf32, #tpu.memory_space<vmem>>, vector<1x8x128xf32>,
    %38 = arith.truncf %36 : vector<1x8x128xf32> to vector<1x8x128xbf16>
    "tpu.trace_start"() <{level = 10 : i32, message = "bls,bsd->bld"}> : () -> ()
    %cst_21 = arith.constant dense<0.000000e+00> : vector<1x8x8xf32>
    %39 = tpu.matmul %38, %23, %cst_21 {dimension_numbers = #tpu.dot_dimension_numbers<[2], [1], [1], [2], [0, 0, 0, 1, 1, 2], [0], [0]>} : vector<1x8x128xbf16>, vector<1x128x8xbf16>, vector<1x8x8xf32> -> vector<1x8x8xf32>
    "tpu.trace_stop"() : () -> ()
    %40 = vector.shape_cast %39 : vector<1x8x8xf32> to vector<8x8xf32>
    %41 = arith.truncf %40 : vector<8x8xf32> to vector<8x8xbf16>
    %c0_22 = arith.constant 0 : index
    %c0_23 = arith.constant 0 : index
    %42 = vector.load %arg17[%c0_22, %c0_23] : memref<8x32xbf16, #tpu.memory_space<vmem>>, vector<8x8xbf16>
    tpu.vector_store %arg17[%c0_22, %c0_23], %41 {strides = array<i32>} : memref<8x32xbf16, #tpu.memory_space<vmem>>, vector<8x8xbf16>,
    %43 = vector.extract_strided_slice %12 {offsets = [0, 0, 8], sizes = [1, 8, 8], strides = [1, 1, 1]} : vector<1x8x32xbf16> to vector<1x8x8xbf16>
    %44 = vector.extract_strided_slice %13 {offsets = [0, 0, 8], sizes = [1, 128, 8], strides = [1, 1, 1]} : vector<1x128x32xbf16> to vector<1x128x8xbf16>
    %45 = vector.extract_strided_slice %14 {offsets = [0, 0, 8], sizes = [1, 128, 8], strides = [1, 1, 1]} : vector<1x128x32xbf16> to vector<1x128x8xbf16>
    "tpu.trace_start"() <{level = 10 : i32, message = "bld,bsd->bls"}> : () -> ()
    %cst_24 = arith.constant dense<0.000000e+00> : vector<1x8x128xf32>
    %46 = tpu.matmul %43, %44, %cst_24 {dimension_numbers = #tpu.dot_dimension_numbers<[2], [2], [1], [1], [0, 0, 0, 1, 1, 1], [0], [0]>} : vector<1x8x8xbf16>, vector<1x128x8xbf16>, vector<1x8x128xf32> -> vector<1x8x128xf32>
    "tpu.trace_stop"() : () -> ()
    %47 = vector.broadcast %20 : vector<1x1x128xf32> to vector<1x8x128xf32>
    %48 = arith.addf %46, %47 : vector<1x8x128xf32>
    %cst_25 = arith.constant dense<0xFF800000> : vector<1x8xf32>
    %49 = vector.multi_reduction <maximumf>, %48, %cst_25 [2] : vector<1x8x128xf32> to vector<1x8xf32>
    %50 = vector.shape_cast %49 : vector<1x8xf32> to vector<1x8x1xf32>
    %51 = vector.broadcast %50 : vector<1x8x1xf32> to vector<1x8x128xf32>
    %52 = arith.subf %48, %51 : vector<1x8x128xf32>
    %53 = math.exp %52 : vector<1x8x128xf32>
    %cst_26 = arith.constant dense<0.000000e+00> : vector<1x8xf32>
    %54 = vector.multi_reduction <add>, %53, %cst_26 [2] : vector<1x8x128xf32> to vector<1x8xf32>
    %55 = vector.shape_cast %54 : vector<1x8xf32> to vector<1x8x1xf32>
    %56 = tpu.reciprocal %55 {approx = true} : vector<1x8x1xf32> -> vector<1x8x1xf32>
    %57 = vector.broadcast %56 : vector<1x8x1xf32> to vector<1x8x128xf32>
    %58 = arith.mulf %53, %57 : vector<1x8x128xf32>
    %c0_27 = arith.constant 0 : index
    %c0_28 = arith.constant 0 : index
    %c0_29 = arith.constant 0 : index
    %59 = vector.load %arg14[%c0_27, %c0_28, %c0_29] : memref<1x8x128xf32, #tpu.memory_space<vmem>>, vector<1x8x128xf32>
    %60 = arith.addf %59, %58 : vector<1x8x128xf32>
    %c0_30 = arith.constant 0 : index
    %c0_31 = arith.constant 0 : index
    %c0_32 = arith.constant 0 : index
    %61 = vector.load %arg14[%c0_30, %c0_31, %c0_32] : memref<1x8x128xf32, #tpu.memory_space<vmem>>, vector<1x8x128xf32>
    tpu.vector_store %arg14[%c0_30, %c0_31, %c0_32], %60 {strides = array<i32>} : memref<1x8x128xf32, #tpu.memory_space<vmem>>, vector<1x8x128xf32>,
    %62 = arith.truncf %58 : vector<1x8x128xf32> to vector<1x8x128xbf16>
    "tpu.trace_start"() <{level = 10 : i32, message = "bls,bsd->bld"}> : () -> ()
    %cst_33 = arith.constant dense<0.000000e+00> : vector<1x8x8xf32>
    %63 = tpu.matmul %62, %45, %cst_33 {dimension_numbers = #tpu.dot_dimension_numbers<[2], [1], [1], [2], [0, 0, 0, 1, 1, 2], [0], [0]>} : vector<1x8x128xbf16>, vector<1x128x8xbf16>, vector<1x8x8xf32> -> vector<1x8x8xf32>
    "tpu.trace_stop"() : () -> ()
    %64 = vector.shape_cast %63 : vector<1x8x8xf32> to vector<8x8xf32>
    %65 = arith.truncf %64 : vector<8x8xf32> to vector<8x8xbf16>
    %c0_34 = arith.constant 0 : index
    %c8 = arith.constant 8 : index
    %66 = vector.load %arg17[%c0_34, %c8] : memref<8x32xbf16, #tpu.memory_space<vmem>>, vector<8x8xbf16>
    tpu.vector_store %arg17[%c0_34, %c8], %65 {strides = array<i32>} : memref<8x32xbf16, #tpu.memory_space<vmem>>, vector<8x8xbf16>,
    %67 = vector.extract_strided_slice %12 {offsets = [0, 0, 16], sizes = [1, 8, 8], strides = [1, 1, 1]} : vector<1x8x32xbf16> to vector<1x8x8xbf16>
    %68 = vector.extract_strided_slice %13 {offsets = [0, 0, 16], sizes = [1, 128, 8], strides = [1, 1, 1]} : vector<1x128x32xbf16> to vector<1x128x8xbf16>
    %69 = vector.extract_strided_slice %14 {offsets = [0, 0, 16], sizes = [1, 128, 8], strides = [1, 1, 1]} : vector<1x128x32xbf16> to vector<1x128x8xbf16>
    "tpu.trace_start"() <{level = 10 : i32, message = "bld,bsd->bls"}> : () -> ()
    %cst_35 = arith.constant dense<0.000000e+00> : vector<1x8x128xf32>
    %70 = tpu.matmul %67, %68, %cst_35 {dimension_numbers = #tpu.dot_dimension_numbers<[2], [2], [1], [1], [0, 0, 0, 1, 1, 1], [0], [0]>} : vector<1x8x8xbf16>, vector<1x128x8xbf16>, vector<1x8x128xf32> -> vector<1x8x128xf32>
    "tpu.trace_stop"() : () -> ()
    %71 = vector.broadcast %20 : vector<1x1x128xf32> to vector<1x8x128xf32>
    %72 = arith.addf %70, %71 : vector<1x8x128xf32>
    %cst_36 = arith.constant dense<0xFF800000> : vector<1x8xf32>
    %73 = vector.multi_reduction <maximumf>, %72, %cst_36 [2] : vector<1x8x128xf32> to vector<1x8xf32>
    %74 = vector.shape_cast %73 : vector<1x8xf32> to vector<1x8x1xf32>
    %75 = vector.broadcast %74 : vector<1x8x1xf32> to vector<1x8x128xf32>
    %76 = arith.subf %72, %75 : vector<1x8x128xf32>
    %77 = math.exp %76 : vector<1x8x128xf32>
    %cst_37 = arith.constant dense<0.000000e+00> : vector<1x8xf32>
    %78 = vector.multi_reduction <add>, %77, %cst_37 [2] : vector<1x8x128xf32> to vector<1x8xf32>
    %79 = vector.shape_cast %78 : vector<1x8xf32> to vector<1x8x1xf32>
    %80 = tpu.reciprocal %79 {approx = true} : vector<1x8x1xf32> -> vector<1x8x1xf32>
    %81 = vector.broadcast %80 : vector<1x8x1xf32> to vector<1x8x128xf32>
    %82 = arith.mulf %77, %81 : vector<1x8x128xf32>
    %c0_38 = arith.constant 0 : index
    %c0_39 = arith.constant 0 : index
    %c0_40 = arith.constant 0 : index
    %83 = vector.load %arg14[%c0_38, %c0_39, %c0_40] : memref<1x8x128xf32, #tpu.memory_space<vmem>>, vector<1x8x128xf32>
    %84 = arith.addf %83, %82 : vector<1x8x128xf32>
    %c0_41 = arith.constant 0 : index
    %c0_42 = arith.constant 0 : index
    %c0_43 = arith.constant 0 : index
    %85 = vector.load %arg14[%c0_41, %c0_42, %c0_43] : memref<1x8x128xf32, #tpu.memory_space<vmem>>, vector<1x8x128xf32>
    tpu.vector_store %arg14[%c0_41, %c0_42, %c0_43], %84 {strides = array<i32>} : memref<1x8x128xf32, #tpu.memory_space<vmem>>, vector<1x8x128xf32>,
    %86 = arith.truncf %82 : vector<1x8x128xf32> to vector<1x8x128xbf16>
    "tpu.trace_start"() <{level = 10 : i32, message = "bls,bsd->bld"}> : () -> ()
    %cst_44 = arith.constant dense<0.000000e+00> : vector<1x8x8xf32>
    %87 = tpu.matmul %86, %69, %cst_44 {dimension_numbers = #tpu.dot_dimension_numbers<[2], [1], [1], [2], [0, 0, 0, 1, 1, 2], [0], [0]>} : vector<1x8x128xbf16>, vector<1x128x8xbf16>, vector<1x8x8xf32> -> vector<1x8x8xf32>
    "tpu.trace_stop"() : () -> ()
    %88 = vector.shape_cast %87 : vector<1x8x8xf32> to vector<8x8xf32>
    %89 = arith.truncf %88 : vector<8x8xf32> to vector<8x8xbf16>
    %c0_45 = arith.constant 0 : index
    %c16 = arith.constant 16 : index
    %90 = vector.load %arg17[%c0_45, %c16] : memref<8x32xbf16, #tpu.memory_space<vmem>>, vector<8x8xbf16>
    tpu.vector_store %arg17[%c0_45, %c16], %89 {strides = array<i32>} : memref<8x32xbf16, #tpu.memory_space<vmem>>, vector<8x8xbf16>,
    %91 = vector.extract_strided_slice %12 {offsets = [0, 0, 24], sizes = [1, 8, 8], strides = [1, 1, 1]} : vector<1x8x32xbf16> to vector<1x8x8xbf16>
    %92 = vector.extract_strided_slice %13 {offsets = [0, 0, 24], sizes = [1, 128, 8], strides = [1, 1, 1]} : vector<1x128x32xbf16> to vector<1x128x8xbf16>
    %93 = vector.extract_strided_slice %14 {offsets = [0, 0, 24], sizes = [1, 128, 8], strides = [1, 1, 1]} : vector<1x128x32xbf16> to vector<1x128x8xbf16>
    "tpu.trace_start"() <{level = 10 : i32, message = "bld,bsd->bls"}> : () -> ()
    %cst_46 = arith.constant dense<0.000000e+00> : vector<1x8x128xf32>
    %94 = tpu.matmul %91, %92, %cst_46 {dimension_numbers = #tpu.dot_dimension_numbers<[2], [2], [1], [1], [0, 0, 0, 1, 1, 1], [0], [0]>} : vector<1x8x8xbf16>, vector<1x128x8xbf16>, vector<1x8x128xf32> -> vector<1x8x128xf32>
    "tpu.trace_stop"() : () -> ()
    %95 = vector.broadcast %20 : vector<1x1x128xf32> to vector<1x8x128xf32>
    %96 = arith.addf %94, %95 : vector<1x8x128xf32>
    %cst_47 = arith.constant dense<0xFF800000> : vector<1x8xf32>
    %97 = vector.multi_reduction <maximumf>, %96, %cst_47 [2] : vector<1x8x128xf32> to vector<1x8xf32>
    %98 = vector.shape_cast %97 : vector<1x8xf32> to vector<1x8x1xf32>
    %99 = vector.broadcast %98 : vector<1x8x1xf32> to vector<1x8x128xf32>
    %100 = arith.subf %96, %99 : vector<1x8x128xf32>
    %101 = math.exp %100 : vector<1x8x128xf32>
    %cst_48 = arith.constant dense<0.000000e+00> : vector<1x8xf32>
    %102 = vector.multi_reduction <add>, %101, %cst_48 [2] : vector<1x8x128xf32> to vector<1x8xf32>
    %103 = vector.shape_cast %102 : vector<1x8xf32> to vector<1x8x1xf32>
    %104 = tpu.reciprocal %103 {approx = true} : vector<1x8x1xf32> -> vector<1x8x1xf32>
    %105 = vector.broadcast %104 : vector<1x8x1xf32> to vector<1x8x128xf32>
    %106 = arith.mulf %101, %105 : vector<1x8x128xf32>
    %c0_49 = arith.constant 0 : index
    %c0_50 = arith.constant 0 : index
    %c0_51 = arith.constant 0 : index
    %107 = vector.load %arg14[%c0_49, %c0_50, %c0_51] : memref<1x8x128xf32, #tpu.memory_space<vmem>>, vector<1x8x128xf32>
    %108 = arith.addf %107, %106 : vector<1x8x128xf32>
    %c0_52 = arith.constant 0 : index
    %c0_53 = arith.constant 0 : index
    %c0_54 = arith.constant 0 : index
    %109 = vector.load %arg14[%c0_52, %c0_53, %c0_54] : memref<1x8x128xf32, #tpu.memory_space<vmem>>, vector<1x8x128xf32>
    tpu.vector_store %arg14[%c0_52, %c0_53, %c0_54], %108 {strides = array<i32>} : memref<1x8x128xf32, #tpu.memory_space<vmem>>, vector<1x8x128xf32>,
    %110 = arith.truncf %106 : vector<1x8x128xf32> to vector<1x8x128xbf16>
    "tpu.trace_start"() <{level = 10 : i32, message = "bls,bsd->bld"}> : () -> ()
    %cst_55 = arith.constant dense<0.000000e+00> : vector<1x8x8xf32>
    %111 = tpu.matmul %110, %93, %cst_55 {dimension_numbers = #tpu.dot_dimension_numbers<[2], [1], [1], [2], [0, 0, 0, 1, 1, 2], [0], [0]>} : vector<1x8x128xbf16>, vector<1x128x8xbf16>, vector<1x8x8xf32> -> vector<1x8x8xf32>
    "tpu.trace_stop"() : () -> ()
    %112 = vector.shape_cast %111 : vector<1x8x8xf32> to vector<8x8xf32>
    %113 = arith.truncf %112 : vector<8x8xf32> to vector<8x8xbf16>
    %c0_56 = arith.constant 0 : index
    %c24 = arith.constant 24 : index
    %114 = vector.load %arg17[%c0_56, %c24] : memref<8x32xbf16, #tpu.memory_space<vmem>>, vector<8x8xbf16>
    tpu.vector_store %arg17[%c0_56, %c24], %113 {strides = array<i32>} : memref<8x32xbf16, #tpu.memory_space<vmem>>, vector<8x8xbf16>,
    %c0_57 = arith.constant 0 : index
    %c0_58 = arith.constant 0 : index
    %c0_59 = arith.constant 0 : index
    %115 = vector.load %arg14[%c0_57, %c0_58, %c0_59] : memref<1x8x128xf32, #tpu.memory_space<vmem>>, vector<1x8x128xf32>
    %cst_60 = arith.constant 2.500000e-01 : f32
    %116 = vector.broadcast %cst_60 : f32 to vector<1x8x128xf32>
    %117 = arith.mulf %115, %116 : vector<1x8x128xf32>
    %c0_61 = arith.constant 0 : index
    %c0_62 = arith.constant 0 : index
    %c0_63 = arith.constant 0 : index
    %118 = vector.load %arg14[%c0_61, %c0_62, %c0_63] : memref<1x8x128xf32, #tpu.memory_space<vmem>>, vector<1x8x128xf32>
    tpu.vector_store %arg14[%c0_61, %c0_62, %c0_63], %117 {strides = array<i32>} : memref<1x8x128xf32, #tpu.memory_space<vmem>>, vector<1x8x128xf32>,
    %c0_64 = arith.constant 0 : index
    %c0_65 = arith.constant 0 : index
    %119 = vector.load %arg17[%c0_64, %c0_65] : memref<8x32xbf16, #tpu.memory_space<vmem>>, vector<8x32xbf16>
    %c0_66 = arith.constant 0 : index
    %c0_67 = arith.constant 0 : index
    %120 = vector.load %arg8[%c0_66, %c0_67] : memref<32x32xbf16, #tpu.memory_space<vmem>>, vector<32x32xbf16>
    %cst_68 = arith.constant dense<0.000000e+00> : vector<8x32xf32>
    %121 = tpu.matmul %119, %120, %cst_68 {dimension_numbers = #tpu.dot_dimension_numbers<[1], [0], [0], [1], [0, 0, 1, 1], [], []>} : vector<8x32xbf16>, vector<32x32xbf16>, vector<8x32xf32> -> vector<8x32xf32>
    %c0_69 = arith.constant 0 : index
    %c0_70 = arith.constant 0 : index
    %122 = vector.load %arg12[%c0_69, %c0_70] : memref<1x32xf32, #tpu.memory_space<vmem>>, vector<1x32xf32>
    %123 = vector.broadcast %122 : vector<1x32xf32> to vector<8x32xf32>
    %124 = arith.addf %121, %123 : vector<8x32xf32>
    %125 = vector.shape_cast %124 : vector<8x32xf32> to vector<1x8x32xf32>
    %c0_71 = arith.constant 0 : index
    %c0_72 = arith.constant 0 : index
    %c0_73 = arith.constant 0 : index
    %126 = vector.load %arg13[%c0_71, %c0_72, %c0_73] : memref<1x8x32xf32, #tpu.memory_space<vmem>>, vector<1x8x32xf32>
    tpu.vector_store %arg13[%c0_71, %c0_72, %c0_73], %125 {strides = array<i32>} : memref<1x8x32xf32, #tpu.memory_space<vmem>>, vector<1x8x32xf32>,
    return
  }
  func.func @transform_0(%arg0: i32, %arg1: i32) -> (i32, i32, i32) {
    %c0_i32 = arith.constant 0 : i32
    %c0_i32_0 = arith.constant 0 : i32
    return %arg0, %arg1, %c0_i32 : i32, i32, i32
  }
  func.func @transform_1(%arg0: i32, %arg1: i32) -> (i32, i32, i32) {
    %c0_i32 = arith.constant 0 : i32
    %c0_i32_0 = arith.constant 0 : i32
    %c0_i32_1 = arith.constant 0 : i32
    return %arg0, %c0_i32, %c0_i32_0 : i32, i32, i32
  }
  func.func @transform_2(%arg0: i32, %arg1: i32) -> (i32, i32, i32) {
    %c0_i32 = arith.constant 0 : i32
    %c0_i32_0 = arith.constant 0 : i32
    %c0_i32_1 = arith.constant 0 : i32
    return %arg0, %c0_i32, %c0_i32_0 : i32, i32, i32
  }
  func.func @transform_3(%arg0: i32, %arg1: i32) -> (i32, i32) {
    %c0_i32 = arith.constant 0 : i32
    %c0_i32_0 = arith.constant 0 : i32
    %c0_i32_1 = arith.constant 0 : i32
    return %c0_i32, %c0_i32_0 : i32, i32
  }
  func.func @transform_4(%arg0: i32, %arg1: i32) -> (i32, i32) {
    %c0_i32 = arith.constant 0 : i32
    %c0_i32_0 = arith.constant 0 : i32
    %c0_i32_1 = arith.constant 0 : i32
    return %c0_i32, %c0_i32_0 : i32, i32
  }
  func.func @transform_5(%arg0: i32, %arg1: i32) -> (i32, i32) {
    %c0_i32 = arith.constant 0 : i32
    %c0_i32_0 = arith.constant 0 : i32
    %c0_i32_1 = arith.constant 0 : i32
    return %c0_i32, %c0_i32_0 : i32, i32
  }
  func.func @transform_6(%arg0: i32, %arg1: i32) -> (i32, i32) {
    %c0_i32 = arith.constant 0 : i32
    %c0_i32_0 = arith.constant 0 : i32
    %c0_i32_1 = arith.constant 0 : i32
    return %c0_i32, %c0_i32_0 : i32, i32
  }
  func.func @transform_7(%arg0: i32, %arg1: i32) -> (i32, i32) {
    %c0_i32 = arith.constant 0 : i32
    %c0_i32_0 = arith.constant 0 : i32
    %c0_i32_1 = arith.constant 0 : i32
    return %c0_i32, %c0_i32_0 : i32, i32
  }
  func.func @transform_8(%arg0: i32, %arg1: i32) -> (i32, i32) {
    %c0_i32 = arith.constant 0 : i32
    %c0_i32_0 = arith.constant 0 : i32
    %c0_i32_1 = arith.constant 0 : i32
    return %c0_i32, %c0_i32_0 : i32, i32
  }
  func.func @transform_9(%arg0: i32, %arg1: i32) -> (i32, i32) {
    %c0_i32 = arith.constant 0 : i32
    %c0_i32_0 = arith.constant 0 : i32
    %c0_i32_1 = arith.constant 0 : i32
    return %c0_i32, %c0_i32_0 : i32, i32
  }
  func.func @transform_10(%arg0: i32, %arg1: i32) -> (i32, i32) {
    %c0_i32 = arith.constant 0 : i32
    %c0_i32_0 = arith.constant 0 : i32
    %c0_i32_1 = arith.constant 0 : i32
    return %c0_i32, %c0_i32_0 : i32, i32
  }
  func.func @transform_11(%arg0: i32, %arg1: i32) -> (i32, i32, i32) {
    %c0_i32 = arith.constant 0 : i32
    %c0_i32_0 = arith.constant 0 : i32
    return %arg0, %arg1, %c0_i32 : i32, i32, i32
  }
  func.func @transform_12(%arg0: i32, %arg1: i32) -> (i32, i32, i32) {
    %c0_i32 = arith.constant 0 : i32
    %c0_i32_0 = arith.constant 0 : i32
    return %arg0, %arg1, %c0_i32 : i32, i32, i32
  }
}

</mosaic_0001>

<llo_original>
// kernel: tpu_custom_call.1
$region0: #{tpu_custom_call.1}
  #allocation0 [shape = 'u32[]', space=smem, size = 0x4, offset = 0x4, fixed_abs, tag = 'smem constant byte address 0x4 - core index']
  #allocation1 [shape = 'u32[144,128]{1,0:T(1,128)}', space=vmem, size = 0x12000, scoped, tag = 'internal scratch']
  #allocation2 [shape = 'bf16[1,128,32]{2,1,0:T(16,128)(2,1)}', space=vmem, size = 0x8000, scoped, tag = 'scratch operand']
  #allocation3 [shape = 'bf16[1,128,32]{2,1,0:T(16,128)(2,1)}', space=vmem, size = 0x8000, scoped, tag = 'scratch operand']
  #allocation4 [shape = 'bf16[8,32]{1,0:T(8,128)(2,1)}', space=vmem, size = 0x800, scoped, tag = 'scratch operand']
  %s0 = inlined_call_operand.vmem [shape: f32[2,8,32], index: 0, kind: input, shape index: {}]
  %s1 = inlined_call_operand.vmem [shape: f32[2,128,32], index: 1, kind: input, shape index: {}]
  %s2 = inlined_call_operand.vmem [shape: f32[2,128,32], index: 2, kind: input, shape index: {}]
  %s3 = inlined_call_operand.vmem [shape: bf16[32,32], index: 3, kind: input, shape index: {}]
  %s4 = inlined_call_operand.vmem [shape: bf16[32,32], index: 4, kind: input, shape index: {}]
  %s5 = inlined_call_operand.vmem [shape: bf16[32,32], index: 5, kind: input, shape index: {}]
  %s6 = inlined_call_operand.vmem [shape: bf16[32,32], index: 6, kind: input, shape index: {}]
  %s7 = inlined_call_operand.vmem [shape: f32[1,32], index: 7, kind: input, shape index: {}]
  %s8 = inlined_call_operand.vmem [shape: f32[1,32], index: 8, kind: input, shape index: {}]
  %s9 = inlined_call_operand.vmem [shape: f32[1,32], index: 9, kind: input, shape index: {}]
  %s10 = inlined_call_operand.vmem [shape: f32[1,32], index: 10, kind: input, shape index: {}]
  %s11 = inlined_call_operand.hbm [shape: f32[2,8,32], index: 11, kind: output, shape index: {0}]
  %s12 = inlined_call_operand.hbm [shape: f32[2,8,128], index: 12, kind: output, shape index: {1}]
  %13 = xla_tuple %s11, %s12
  %s14 = sld [smem:[#allocation0]]
  $region89: #{tpu_custom_call.1} parent=0
    _
  %s16 = ssub.s32 1, %s14
  %s17 = scalar_select 0, %s16, %s14
  $region1: #{tpu_custom_call.1} parent=0
    #allocation5 [shape = 'u8[8192]{0}', space=vmem, size = 0x2000, scoped, tag = 'output window, operand 0']
    #allocation6 [shape = 's32[2]{0}', space=sflag, size = 0x8, scoped, tag = 'scoped memory for tpu_custom_call.1']
    #allocation7 [shape = 'u8[8192]{0}', space=vmem, size = 0x2000, scoped, tag = 'output window, operand 1']
    #allocation8 [shape = 's32[2]{0}', space=sflag, size = 0x8, scoped, tag = 'scoped memory for tpu_custom_call.1']
    %18 = vsyncpa [#allocation6], 0
    %s19 = scalar_lea.sflag [#allocation6], 1
    %20 = vsyncpa %s19, 0
    %21 = vsyncpa [#allocation8], 0
    %s22 = scalar_lea.sflag [#allocation8], 1
    %23 = vsyncpa %s22, 0
    loop: start=0, step=1, limit=4
    $region2: #{tpu_custom_call.1} parent=1 // loop_pre_header
      _
    $region3: #{tpu_custom_call.1} parent=1 // loop_header
      %s25 = sphi 0, %s29
      %p26 = scmp.ge.s32.totalorder %s25, 4
      %s32 = sphi 0, %s44
      %s33 = sphi 0, %s40
      %s34 = sphi 0, %s32
      %s35 = sphi 0, %s33
      %s36 = sphi 0, %s34
      %s37 = sphi 0, %s35
      %s49 = sphi 0, %s51
      %s52 = sphi 0, %s49
      %s53 = sphi 0, %s52
      %s69 = sphi 0, %s53
      %s75 = sphi 0, %s77
      %s78 = sphi 0, %s75
      %s79 = sphi 0, %s78
      %s95 = sphi 0, %s79
      %s101 = sphi 0, %s103
      %s104 = sphi 0, %s101
      %s105 = sphi 0, %s104
      %s121 = sphi 0, %s105
      %s125 = sphi 0, %s125
      %s127 = sphi 0, %s125
      %s128 = sphi 0, %s127
      %s142 = sphi 0, %s128
      %s146 = sphi 0, %s146
      %s148 = sphi 0, %s146
      %s149 = sphi 0, %s148
      %s163 = sphi 0, %s149
      %s167 = sphi 0, %s167
      %s169 = sphi 0, %s167
      %s170 = sphi 0, %s169
      %s184 = sphi 0, %s170
      %s188 = sphi 0, %s188
      %s190 = sphi 0, %s188
      %s191 = sphi 0, %s190
      %s205 = sphi 0, %s191
      %s209 = sphi 0, %s209
      %s211 = sphi 0, %s209
      %s212 = sphi 0, %s211
      %s226 = sphi 0, %s212
      %s230 = sphi 0, %s230
      %s232 = sphi 0, %s230
      %s233 = sphi 0, %s232
      %s247 = sphi 0, %s233
      %s251 = sphi 0, %s251
      %s253 = sphi 0, %s251
      %s254 = sphi 0, %s253
      %s268 = sphi 0, %s254
      %s272 = sphi 0, %s272
      %s274 = sphi 0, %s272
      %s275 = sphi 0, %s274
      %s289 = sphi 0, %s275
      %s297 = sphi 0, %s299
      %s300 = sphi 0, %s297
      %s301 = sphi 0, %s300
      %s317 = sphi 0, %s301
      %s325 = sphi 0, %s327
      %s328 = sphi 0, %s325
      %s329 = sphi 0, %s328
      %s345 = sphi 0, %s329
    $region4: #{tpu_custom_call.1} parent=1 // loop_header_branch
      %28 = sbr.rel (%p26) target = $region8
    $region5: #{tpu_custom_call.1} parent=1 // loop_body
      %s30 = ssub.s32 %s25, 1
      %s31 = ssub.s32 %s25, 2
      %s38 = sadd.s32 1, %s33
      %p39 = scmp.ge.s32.totalorder %s38, 1
      %s40 = scalar_select %p39, 0, %s38
      %s41 = sadd.s32 1, %s32
      %s42 = scalar_select %p39, %s41, %s32
      %p43 = scmp.ge.s32.totalorder %s42, 2
      %s44 = scalar_select %p43, 0, %s42
      %s45 = ssub.s32 %s32, %s44
      %s46 = ssub.s32 %s33, %s40
      %s47 = sor.u32 %s45, %s46
      %p48 = scmp.eq.s32.totalorder %s47, 0
      %s50 = sadd.s32 %s49, 1
      %s51 = scalar_select %p48, %s49, %s50
      %p54 = pneg %p48
      %p55 = scmp.eq.s32.totalorder %s25, 1
      %p56 = por %p54, %p55
      %p57 = scmp.ne.s32.totalorder %s49, %s52
      %p58 = scmp.eq.s32.totalorder %s25, 0
      %p59 = por %p57, %p58
      %p60 = scmp.ne.s32.totalorder %s49, %s52
      %p61 = scmp.eq.s32.totalorder %s30, 1
      %p62 = por %p60, %p61
      %p63 = scmp.ne.s32.totalorder %s52, %s53
      %p64 = scmp.eq.s32.totalorder %s30, 0
      %p65 = por %p63, %p64
      %p66 = scmp.ne.s32.totalorder %s52, %s53
      %p67 = scmp.eq.s32.totalorder %s31, 1
      %p68 = por %p66, %p67
      %p70 = scmp.ne.s32.totalorder %s53, %s69
      %p71 = scmp.eq.s32.totalorder %s31, 0
      %p72 = por %p70, %p71
      %s73 = ssub.s32 %s32, %s44
      %p74 = scmp.eq.s32.totalorder %s73, 0
      %s76 = sadd.s32 %s75, 1
      %s77 = scalar_select %p74, %s75, %s76
      %p80 = pneg %p74
      %p81 = scmp.eq.s32.totalorder %s25, 1
      %p82 = por %p80, %p81
      %p83 = scmp.ne.s32.totalorder %s75, %s78
      %p84 = scmp.eq.s32.totalorder %s25, 0
      %p85 = por %p83, %p84
      %p86 = scmp.ne.s32.totalorder %s75, %s78
      %p87 = scmp.eq.s32.totalorder %s30, 1
      %p88 = por %p86, %p87
      %p89 = scmp.ne.s32.totalorder %s78, %s79
      %p90 = scmp.eq.s32.totalorder %s30, 0
      %p91 = por %p89, %p90
      %p92 = scmp.ne.s32.totalorder %s78, %s79
      %p93 = scmp.eq.s32.totalorder %s31, 1
      %p94 = por %p92, %p93
      %p96 = scmp.ne.s32.totalorder %s79, %s95
      %p97 = scmp.eq.s32.totalorder %s31, 0
      %p98 = por %p96, %p97
      %s99 = ssub.s32 %s32, %s44
      %p100 = scmp.eq.s32.totalorder %s99, 0
      %s102 = sadd.s32 %s101, 1
      %s103 = scalar_select %p100, %s101, %s102
      %p106 = pneg %p100
      %p107 = scmp.eq.s32.totalorder %s25, 1
      %p108 = por %p106, %p107
      %p109 = scmp.ne.s32.totalorder %s101, %s104
      %p110 = scmp.eq.s32.totalorder %s25, 0
      %p111 = por %p109, %p110
      %p112 = scmp.ne.s32.totalorder %s101, %s104
      %p113 = scmp.eq.s32.totalorder %s30, 1
      %p114 = por %p112, %p113
      %p115 = scmp.ne.s32.totalorder %s104, %s105
      %p116 = scmp.eq.s32.totalorder %s30, 0
      %p117 = por %p115, %p116
      %p118 = scmp.ne.s32.totalorder %s104, %s105
      %p119 = scmp.eq.s32.totalorder %s31, 1
      %p120 = por %p118, %p119
      %p122 = scmp.ne.s32.totalorder %s105, %s121
      %p123 = scmp.eq.s32.totalorder %s31, 0
      %p124 = por %p122, %p123
      %s126 = sadd.s32 %s125, 1
      %p129 = scmp.eq.s32.totalorder %s25, 1
      %p130 = scmp.ne.s32.totalorder %s125, %s127
      %p131 = scmp.eq.s32.totalorder %s25, 0
      %p132 = por %p130, %p131
      %p133 = scmp.ne.s32.totalorder %s125, %s127
      %p134 = scmp.eq.s32.totalorder %s30, 1
      %p135 = por %p133, %p134
      %p136 = scmp.ne.s32.totalorder %s127, %s128
      %p137 = scmp.eq.s32.totalorder %s30, 0
      %p138 = por %p136, %p137
      %p139 = scmp.ne.s32.totalorder %s127, %s128
      %p140 = scmp.eq.s32.totalorder %s31, 1
      %p141 = por %p139, %p140
      %p143 = scmp.ne.s32.totalorder %s128, %s142
      %p144 = scmp.eq.s32.totalorder %s31, 0
      %p145 = por %p143, %p144
      %s147 = sadd.s32 %s146, 1
      %p150 = scmp.eq.s32.totalorder %s25, 1
      %p151 = scmp.ne.s32.totalorder %s146, %s148
      %p152 = scmp.eq.s32.totalorder %s25, 0
      %p153 = por %p151, %p152
      %p154 = scmp.ne.s32.totalorder %s146, %s148
      %p155 = scmp.eq.s32.totalorder %s30, 1
      %p156 = por %p154, %p155
      %p157 = scmp.ne.s32.totalorder %s148, %s149
      %p158 = scmp.eq.s32.totalorder %s30, 0
      %p159 = por %p157, %p158
      %p160 = scmp.ne.s32.totalorder %s148, %s149
      %p161 = scmp.eq.s32.totalorder %s31, 1
      %p162 = por %p160, %p161
      %p164 = scmp.ne.s32.totalorder %s149, %s163
      %p165 = scmp.eq.s32.totalorder %s31, 0
      %p166 = por %p164, %p165
      %s168 = sadd.s32 %s167, 1
      %p171 = scmp.eq.s32.totalorder %s25, 1
      %p172 = scmp.ne.s32.totalorder %s167, %s169
      %p173 = scmp.eq.s32.totalorder %s25, 0
      %p174 = por %p172, %p173
      %p175 = scmp.ne.s32.totalorder %s167, %s169
      %p176 = scmp.eq.s32.totalorder %s30, 1
      %p177 = por %p175, %p176
      %p178 = scmp.ne.s32.totalorder %s169, %s170
      %p179 = scmp.eq.s32.totalorder %s30, 0
      %p180 = por %p178, %p179
      %p181 = scmp.ne.s32.totalorder %s169, %s170
      %p182 = scmp.eq.s32.totalorder %s31, 1
      %p183 = por %p181, %p182
      %p185 = scmp.ne.s32.totalorder %s170, %s184
      %p186 = scmp.eq.s32.totalorder %s31, 0
      %p187 = por %p185, %p186
      %s189 = sadd.s32 %s188, 1
      %p192 = scmp.eq.s32.totalorder %s25, 1
      %p193 = scmp.ne.s32.totalorder %s188, %s190
      %p194 = scmp.eq.s32.totalorder %s25, 0
      %p195 = por %p193, %p194
      %p196 = scmp.ne.s32.totalorder %s188, %s190
      %p197 = scmp.eq.s32.totalorder %s30, 1
      %p198 = por %p196, %p197
      %p199 = scmp.ne.s32.totalorder %s190, %s191
      %p200 = scmp.eq.s32.totalorder %s30, 0
      %p201 = por %p199, %p200
      %p202 = scmp.ne.s32.totalorder %s190, %s191
      %p203 = scmp.eq.s32.totalorder %s31, 1
      %p204 = por %p202, %p203
      %p206 = scmp.ne.s32.totalorder %s191, %s205
      %p207 = scmp.eq.s32.totalorder %s31, 0
      %p208 = por %p206, %p207
      %s210 = sadd.s32 %s209, 1
      %p213 = scmp.eq.s32.totalorder %s25, 1
      %p214 = scmp.ne.s32.totalorder %s209, %s211
      %p215 = scmp.eq.s32.totalorder %s25, 0
      %p216 = por %p214, %p215
      %p217 = scmp.ne.s32.totalorder %s209, %s211
      %p218 = scmp.eq.s32.totalorder %s30, 1
      %p219 = por %p217, %p218
      %p220 = scmp.ne.s32.totalorder %s211, %s212
      %p221 = scmp.eq.s32.totalorder %s30, 0
      %p222 = por %p220, %p221
      %p223 = scmp.ne.s32.totalorder %s211, %s212
      %p224 = scmp.eq.s32.totalorder %s31, 1
      %p225 = por %p223, %p224
      %p227 = scmp.ne.s32.totalorder %s212, %s226
      %p228 = scmp.eq.s32.totalorder %s31, 0
      %p229 = por %p227, %p228
      %s231 = sadd.s32 %s230, 1
      %p234 = scmp.eq.s32.totalorder %s25, 1
      %p235 = scmp.ne.s32.totalorder %s230, %s232
      %p236 = scmp.eq.s32.totalorder %s25, 0
      %p237 = por %p235, %p236
      %p238 = scmp.ne.s32.totalorder %s230, %s232
      %p239 = scmp.eq.s32.totalorder %s30, 1
      %p240 = por %p238, %p239
      %p241 = scmp.ne.s32.totalorder %s232, %s233
      %p242 = scmp.eq.s32.totalorder %s30, 0
      %p243 = por %p241, %p242
      %p244 = scmp.ne.s32.totalorder %s232, %s233
      %p245 = scmp.eq.s32.totalorder %s31, 1
      %p246 = por %p244, %p245
      %p248 = scmp.ne.s32.totalorder %s233, %s247
      %p249 = scmp.eq.s32.totalorder %s31, 0
      %p250 = por %p248, %p249
      %s252 = sadd.s32 %s251, 1
      %p255 = scmp.eq.s32.totalorder %s25, 1
      %p256 = scmp.ne.s32.totalorder %s251, %s253
      %p257 = scmp.eq.s32.totalorder %s25, 0
      %p258 = por %p256, %p257
      %p259 = scmp.ne.s32.totalorder %s251, %s253
      %p260 = scmp.eq.s32.totalorder %s30, 1
      %p261 = por %p259, %p260
      %p262 = scmp.ne.s32.totalorder %s253, %s254
      %p263 = scmp.eq.s32.totalorder %s30, 0
      %p264 = por %p262, %p263
      %p265 = scmp.ne.s32.totalorder %s253, %s254
      %p266 = scmp.eq.s32.totalorder %s31, 1
      %p267 = por %p265, %p266
      %p269 = scmp.ne.s32.totalorder %s254, %s268
      %p270 = scmp.eq.s32.totalorder %s31, 0
      %p271 = por %p269, %p270
      %s273 = sadd.s32 %s272, 1
      %p276 = scmp.eq.s32.totalorder %s25, 1
      %p277 = scmp.ne.s32.totalorder %s272, %s274
      %p278 = scmp.eq.s32.totalorder %s25, 0
      %p279 = por %p277, %p278
      %p280 = scmp.ne.s32.totalorder %s272, %s274
      %p281 = scmp.eq.s32.totalorder %s30, 1
      %p282 = por %p280, %p281
      %p283 = scmp.ne.s32.totalorder %s274, %s275
      %p284 = scmp.eq.s32.totalorder %s30, 0
      %p285 = por %p283, %p284
      %p286 = scmp.ne.s32.totalorder %s274, %s275
      %p287 = scmp.eq.s32.totalorder %s31, 1
      %p288 = por %p286, %p287
      %p290 = scmp.ne.s32.totalorder %s275, %s289
      %p291 = scmp.eq.s32.totalorder %s31, 0
      %p292 = por %p290, %p291
      %s293 = ssub.s32 %s32, %s44
      %s294 = ssub.s32 %s33, %s40
      %s295 = sor.u32 %s293, %s294
      %p296 = scmp.eq.s32.totalorder %s295, 0
      %s298 = sadd.s32 %s297, 1
      %s299 = scalar_select %p296, %s297, %s298
      %p302 = pneg %p296
      %p303 = scmp.eq.s32.totalorder %s25, 1
      %p304 = por %p302, %p303
      %p305 = scmp.ne.s32.totalorder %s297, %s300
      %p306 = scmp.eq.s32.totalorder %s25, 0
      %p307 = por %p305, %p306
      %p308 = scmp.ne.s32.totalorder %s297, %s300
      %p309 = scmp.eq.s32.totalorder %s30, 1
      %p310 = por %p308, %p309
      %p311 = scmp.ne.s32.totalorder %s300, %s301
      %p312 = scmp.eq.s32.totalorder %s30, 0
      %p313 = por %p311, %p312
      %p314 = scmp.ne.s32.totalorder %s300, %s301
      %p315 = scmp.eq.s32.totalorder %s31, 1
      %p316 = por %p314, %p315
      %p318 = scmp.ne.s32.totalorder %s301, %s317
      %p319 = scmp.eq.s32.totalorder %s31, 0
      %p320 = por %p318, %p319
      %s321 = ssub.s32 %s32, %s44
      %s322 = ssub.s32 %s33, %s40
      %s323 = sor.u32 %s321, %s322
      %p324 = scmp.eq.s32.totalorder %s323, 0
      %s326 = sadd.s32 %s325, 1
      %s327 = scalar_select %p324, %s325, %s326
      %p330 = pneg %p324
      %p331 = scmp.eq.s32.totalorder %s25, 1
      %p332 = por %p330, %p331
      %p333 = scmp.ne.s32.totalorder %s325, %s328
      %p334 = scmp.eq.s32.totalorder %s25, 0
      %p335 = por %p333, %p334
      %p336 = scmp.ne.s32.totalorder %s325, %s328
      %p337 = scmp.eq.s32.totalorder %s30, 1
      %p338 = por %p336, %p337
      %p339 = scmp.ne.s32.totalorder %s328, %s329
      %p340 = scmp.eq.s32.totalorder %s30, 0
      %p341 = por %p339, %p340
      %p342 = scmp.ne.s32.totalorder %s328, %s329
      %p343 = scmp.eq.s32.totalorder %s31, 1
      %p344 = por %p342, %p343
      %p346 = scmp.ne.s32.totalorder %s329, %s345
      %p347 = scmp.eq.s32.totalorder %s31, 0
      %p348 = por %p346, %p347
      %p349 = scmp.le.s32.totalorder 1, %s25
      %p350 = scmp.lt.s32.totalorder %s25, 3
      %p351 = pnand %p349, %p350
      %p352 = pneg %p351
      // Predicated region
      $region9: #{tpu_custom_call.1} parent=5 // pred_check
        _
      $region10: #{tpu_custom_call.1} parent=5 // pred_check_branch
        %354 = sbr.rel (%p351) target = $region12
      $region11: #{tpu_custom_call.1} parent=5 // pred_region
        %s355 = ssub.s32 %s25, 1
        // Predicated region
        $region13: #{tpu_custom_call.1} parent=11 // pred_check
          %p356 = pneg %p138
        $region14: #{tpu_custom_call.1} parent=11 // pred_check_branch
          %358 = sbr.rel (%p356) target = $region16
        $region15: #{tpu_custom_call.1} parent=11 // pred_region
          _
        $region16: #{tpu_custom_call.1} parent=11 // pred_fallthru
          _
        // Predicated region
        $region17: #{tpu_custom_call.1} parent=11 // pred_check
          %p359 = pneg %p159
        $region18: #{tpu_custom_call.1} parent=11 // pred_check_branch
          %361 = sbr.rel (%p359) target = $region20
        $region19: #{tpu_custom_call.1} parent=11 // pred_region
          _
        $region20: #{tpu_custom_call.1} parent=11 // pred_fallthru
          _
        // Predicated region
        $region21: #{tpu_custom_call.1} parent=11 // pred_check
          %p362 = pneg %p180
        $region22: #{tpu_custom_call.1} parent=11 // pred_check_branch
          %364 = sbr.rel (%p362) target = $region24
        $region23: #{tpu_custom_call.1} parent=11 // pred_region
          _
        $region24: #{tpu_custom_call.1} parent=11 // pred_fallthru
          _
        // Predicated region
        $region25: #{tpu_custom_call.1} parent=11 // pred_check
          %p365 = pneg %p201
        $region26: #{tpu_custom_call.1} parent=11 // pred_check_branch
          %367 = sbr.rel (%p365) target = $region28
        $region27: #{tpu_custom_call.1} parent=11 // pred_region
          _
        $region28: #{tpu_custom_call.1} parent=11 // pred_fallthru
          _
        // Predicated region
        $region29: #{tpu_custom_call.1} parent=11 // pred_check
          %p368 = pneg %p222
        $region30: #{tpu_custom_call.1} parent=11 // pred_check_branch
          %370 = sbr.rel (%p368) target = $region32
        $region31: #{tpu_custom_call.1} parent=11 // pred_region
          _
        $region32: #{tpu_custom_call.1} parent=11 // pred_fallthru
          _
        // Predicated region
        $region33: #{tpu_custom_call.1} parent=11 // pred_check
          %p371 = pneg %p243
        $region34: #{tpu_custom_call.1} parent=11 // pred_check_branch
          %373 = sbr.rel (%p371) target = $region36
        $region35: #{tpu_custom_call.1} parent=11 // pred_region
          _
        $region36: #{tpu_custom_call.1} parent=11 // pred_fallthru
          _
        // Predicated region
        $region37: #{tpu_custom_call.1} parent=11 // pred_check
          %p374 = pneg %p264
        $region38: #{tpu_custom_call.1} parent=11 // pred_check_branch
          %376 = sbr.rel (%p374) target = $region40
        $region39: #{tpu_custom_call.1} parent=11 // pred_region
          _
        $region40: #{tpu_custom_call.1} parent=11 // pred_fallthru
          _
        // Predicated region
        $region41: #{tpu_custom_call.1} parent=11 // pred_check
          %p377 = pneg %p285
        $region42: #{tpu_custom_call.1} parent=11 // pred_check_branch
          %379 = sbr.rel (%p377) target = $region44
        $region43: #{tpu_custom_call.1} parent=11 // pred_region
          _
        $region44: #{tpu_custom_call.1} parent=11 // pred_fallthru
          _
      $region12: #{tpu_custom_call.1} parent=5 // pred_fallthru
        _
      %p380 = scmp.lt.s32.totalorder %s25, 2
      // Predicated region
      $region45: #{tpu_custom_call.1} parent=5 // pred_check
        %p381 = pneg %p380
      $region46: #{tpu_custom_call.1} parent=5 // pred_check_branch
        %383 = sbr.rel (%p381) target = $region48
      $region47: #{tpu_custom_call.1} parent=5 // pred_region
        // Predicated region
        $region49: #{tpu_custom_call.1} parent=47 // pred_check
          %p384 = pneg %p59
        $region50: #{tpu_custom_call.1} parent=47 // pred_check_branch
          %386 = sbr.rel (%p384) target = $region52
        $region51: #{tpu_custom_call.1} parent=47 // pred_region
          %p387 = scmp.lt.s32.totalorder %s32, 1
          %s388 = scalar_select %p387, %s32, 1
          %p389 = scmp.lt.s32.totalorder %s33, 0
          %s390 = scalar_select %p389, %s33, 0
          %s391 = sadd.s32 %s390, %s388
          %s392 = smul.addr %s391, 8
          %s393 = scalar_lea.vmem %s0, %s392
        $region52: #{tpu_custom_call.1} parent=47 // pred_fallthru
          _
        // Predicated region
        $region53: #{tpu_custom_call.1} parent=47 // pred_check
          %p394 = pneg %p85
        $region54: #{tpu_custom_call.1} parent=47 // pred_check_branch
          %396 = sbr.rel (%p394) target = $region56
        $region55: #{tpu_custom_call.1} parent=47 // pred_region
          %p397 = scmp.lt.s32.totalorder %s32, 1
          %s398 = scalar_select %p397, %s32, 1
          %s399 = smul.addr %s398, 16
          %s400 = smul.addr %s399, 8
          %s401 = scalar_lea.vmem %s1, %s400
        $region56: #{tpu_custom_call.1} parent=47 // pred_fallthru
          _
        // Predicated region
        $region57: #{tpu_custom_call.1} parent=47 // pred_check
          %p402 = pneg %p111
        $region58: #{tpu_custom_call.1} parent=47 // pred_check_branch
          %404 = sbr.rel (%p402) target = $region60
        $region59: #{tpu_custom_call.1} parent=47 // pred_region
          %p405 = scmp.lt.s32.totalorder %s32, 1
          %s406 = scalar_select %p405, %s32, 1
          %s407 = smul.addr %s406, 16
          %s408 = smul.addr %s407, 8
          %s409 = scalar_lea.vmem %s2, %s408
        $region60: #{tpu_custom_call.1} parent=47 // pred_fallthru
          _
      $region48: #{tpu_custom_call.1} parent=5 // pred_fallthru
        _
      %p410 = scmp.le.s32.totalorder 1, %s25
      %p411 = scmp.lt.s32.totalorder %s25, 3
      %p412 = pnand %p410, %p411
      %p413 = pneg %p412
      // Predicated region
      $region61: #{tpu_custom_call.1} parent=5 // pred_check
        _
      $region62: #{tpu_custom_call.1} parent=5 // pred_check_branch
        %415 = sbr.rel (%p412) target = $region64
      $region63: #{tpu_custom_call.1} parent=5 // pred_region
        %s416 = ssub.s32 %s25, 1
        %p417 = scmp.lt.s32.totalorder %s34, 1
        %s418 = scalar_select %p417, %s34, 1
        %p419 = scmp.lt.s32.totalorder %s35, 0
        %s420 = scalar_select %p419, %s35, 0
        %s421 = sadd.s32 %s420, %s418
        %s422 = smul.addr %s421, 8
        %s423 = scalar_lea.vmem %s0, %s422
        %p424 = pneg %p65
        %p425 = pneg %p62
        %p426 = scmp.lt.s32.totalorder %s34, 1
        %s427 = scalar_select %p426, %s34, 1
        %s428 = smul.addr %s427, 16
        %s429 = smul.addr %s428, 8
        %s430 = scalar_lea.vmem %s1, %s429
        %p431 = pneg %p91
        %p432 = pneg %p88
        %p433 = scmp.lt.s32.totalorder %s34, 1
        %s434 = scalar_select %p433, %s34, 1
        %s435 = smul.addr %s434, 16
        %s436 = smul.addr %s435, 8
        %s437 = scalar_lea.vmem %s2, %s436
        %p438 = pneg %p117
        %p439 = pneg %p114
        %p440 = pneg %p138
        %p441 = pneg %p135
        %p442 = pneg %p159
        %p443 = pneg %p156
        %p444 = pneg %p180
        %p445 = pneg %p177
        %p446 = pneg %p201
        %p447 = pneg %p198
        %p448 = pneg %p222
        %p449 = pneg %p219
        %p450 = pneg %p243
        %p451 = pneg %p240
        %p452 = pneg %p264
        %p453 = pneg %p261
        %p454 = pneg %p285
        %p455 = pneg %p282
        %p456 = pneg %p313
        %p457 = pneg %p310
        %s458 = sand.u32 %s300, 1
        %s459 = scalar_lea.sflag [#allocation6], %s458
        %s460 = sand.u32 %s300, 1
        %s461 = smul.addr %s460, 8
        %s462 = scalar_lea.vmem [#allocation5], %s461
        %p463 = pneg %p341
        %p464 = pneg %p338
        %s465 = sand.u32 %s328, 1
        %s466 = scalar_lea.sflag [#allocation8], %s465
        %s467 = sand.u32 %s328, 1
        %s468 = smul.addr %s467, 8
        %s469 = scalar_lea.vmem [#allocation7], %s468
        %p470 = scmp.lt.s32.totalorder %s34, 1
        %s471 = scalar_select %p470, %s34, 1
        %p472 = scmp.lt.s32.totalorder %s35, 0
        %s473 = scalar_select %p472, %s35, 0
        %s474 = sadd.s32 %s473, %s471
        %s475 = smul.addr %s474, 8
        %s476 = scalar_lea.vmem %s0, %s475
        %p477 = scmp.lt.s32.totalorder %s34, 1
        %s478 = scalar_select %p477, %s34, 1
        %s479 = smul.addr %s478, 16
        %s480 = smul.addr %s479, 8
        %s481 = scalar_lea.vmem %s1, %s480
        %p482 = scmp.lt.s32.totalorder %s34, 1
        %s483 = scalar_select %p482, %s34, 1
        %s484 = smul.addr %s483, 16
        %s485 = smul.addr %s484, 8
        %s486 = scalar_lea.vmem %s2, %s485
        %p488 = scmp.eq.s32.totalorder %s35, 0
        // Predicated region
        $region65: #{tpu_custom_call.1} parent=63 // pred_check
          %p489 = pneg %p488
        $region66: #{tpu_custom_call.1} parent=63 // pred_check_branch
          %491 = sbr.rel (%p489) target = $region68
        $region67: #{tpu_custom_call.1} parent=63 // pred_region
          %v492 = vld [vmem:[%s481] sm:$0xff]
          %v493 = vld [vmem:[%s481 + $0x8] sm:$0xff]
          %v494 = vld [vmem:[%s481 + $0x10] sm:$0xff]
          %v495 = vld [vmem:[%s481 + $0x18] sm:$0xff]
          %v496 = vld [vmem:[%s481 + $0x20] sm:$0xff]
          %v497 = vld [vmem:[%s481 + $0x28] sm:$0xff]
          %v498 = vld [vmem:[%s481 + $0x30] sm:$0xff]
          %v499 = vld [vmem:[%s481 + $0x38] sm:$0xff]
          %v500 = vld [vmem:[%s481 + $0x40] sm:$0xff]
          %v501 = vld [vmem:[%s481 + $0x48] sm:$0xff]
          %v502 = vld [vmem:[%s481 + $0x50] sm:$0xff]
          %v503 = vld [vmem:[%s481 + $0x58] sm:$0xff]
          %v504 = vld [vmem:[%s481 + $0x60] sm:$0xff]
          %v505 = vld [vmem:[%s481 + $0x68] sm:$0xff]
          %v506 = vld [vmem:[%s481 + $0x70] sm:$0xff]
          %v507 = vld [vmem:[%s481 + $0x78] sm:$0xff]
          %v508 = vpack.c.bf16 %v493, %v492
          %v509 = vpack.c.bf16 %v495, %v494
          %v510 = vpack.c.bf16 %v497, %v496
          %v511 = vpack.c.bf16 %v499, %v498
          %v512 = vpack.c.bf16 %v501, %v500
          %v513 = vpack.c.bf16 %v503, %v502
          %v514 = vpack.c.bf16 %v505, %v504
          %v515 = vpack.c.bf16 %v507, %v506
          %v516 = vld [vmem:[%s486] sm:$0xff]
          %v517 = vld [vmem:[%s486 + $0x8] sm:$0xff]
          %v518 = vld [vmem:[%s486 + $0x10] sm:$0xff]
          %v519 = vld [vmem:[%s486 + $0x18] sm:$0xff]
          %v520 = vld [vmem:[%s486 + $0x20] sm:$0xff]
          %v521 = vld [vmem:[%s486 + $0x28] sm:$0xff]
          %v522 = vld [vmem:[%s486 + $0x30] sm:$0xff]
          %v523 = vld [vmem:[%s486 + $0x38] sm:$0xff]
          %v524 = vld [vmem:[%s486 + $0x40] sm:$0xff]
          %v525 = vld [vmem:[%s486 + $0x48] sm:$0xff]
          %v526 = vld [vmem:[%s486 + $0x50] sm:$0xff]
          %v527 = vld [vmem:[%s486 + $0x58] sm:$0xff]
          %v528 = vld [vmem:[%s486 + $0x60] sm:$0xff]
          %v529 = vld [vmem:[%s486 + $0x68] sm:$0xff]
          %v530 = vld [vmem:[%s486 + $0x70] sm:$0xff]
          %v531 = vld [vmem:[%s486 + $0x78] sm:$0xff]
          %v532 = vpack.c.bf16 %v517, %v516
          %v533 = vpack.c.bf16 %v519, %v518
          %v534 = vpack.c.bf16 %v521, %v520
          %v535 = vpack.c.bf16 %v523, %v522
          %v536 = vpack.c.bf16 %v525, %v524
          %v537 = vpack.c.bf16 %v527, %v526
          %v538 = vpack.c.bf16 %v529, %v528
          %v539 = vpack.c.bf16 %v531, %v530
          %v540 = vld [vmem:[%s4] sm:$0xf]
          %v541 = vld [vmem:[%s4 + $0x4] sm:$0xf]
          %v542 = vld [vmem:[%s4 + $0x8] sm:$0xf]
          %v543 = vld [vmem:[%s4 + $0xc] sm:$0xf]
          %v544 = vld [vmem:[%s8] sm:$0x1]
          %v546 = vlaneseq
          %v547 = vshrl.u32 %v546, 7
          %v548 = vsub.s32 0, %v547
          %v549 = vrot.slane %v544, %v548
          %v555 = vunpack.c.l.b16 %v540
          %v556 = vunpack.c.l.b16 %v541
          %v557 = vunpack.c.l.b16 %v542
          %v558 = vunpack.c.l.b16 %v543
          %v559 = vpack.c.b16 %v556, %v555
          %v560 = vpack.c.b16 %v558, %v557
          %vm563 = vcmask 261120
          %v565 = vsel %vm563, %v508, 0
          %v568 = vsel %vm563, %v509, 0
          %v571 = vsel %vm563, %v510, 0
          %v574 = vsel %vm563, %v511, 0
          %v577 = vsel %vm563, %v512, 0
          %v580 = vsel %vm563, %v513, 0
          %v583 = vsel %vm563, %v514, 0
          %v586 = vsel %vm563, %v515, 0
          %588 = vmatprep.subr.bf16.mxu0 0
          %589 = vmatpush1.bf16.msra.mxu0 %v559
          %590 = vmatprep.subr.bf16.mxu0 0
          %591 = vmatpush1.bf16.msra.mxu0 %v560
          %592 = vmatprep.subr.bf16.mxu0 0
          %593 = vmatpush1.bf16.msra.mxu0 0
          %594 = vmatprep.subr.bf16.mxu0 0
          %595 = vmatpush1.bf16.msra.mxu0 0
          %596 = vmatprep.subr.bf16.mxu0 0
          %597 = vmatpush1.bf16.msra.mxu0 0
          %598 = vmatprep.subr.bf16.mxu0 0
          %599 = vmatpush1.bf16.msra.mxu0 0
          %600 = vmatprep.subr.bf16.mxu0 0
          %601 = vmatpush1.bf16.msra.mxu0 0
          %602 = vmatprep.subr.bf16.mxu0 0
          %603 = vmatpush1.bf16.msra.mxu0 0
          %604 = vmatprep.subr.bf16.mxu0 0
          %605 = vmatpush1.bf16.msra.mxu0 0
          %606 = vmatprep.subr.bf16.mxu0 0
          %607 = vmatpush1.bf16.msra.mxu0 0
          %608 = vmatprep.subr.bf16.mxu0 0
          %609 = vmatpush1.bf16.msra.mxu0 0
          %610 = vmatprep.subr.bf16.mxu0 0
          %611 = vmatpush1.bf16.msra.mxu0 0
          %612 = vmatprep.subr.bf16.mxu0 0
          %613 = vmatpush1.bf16.msra.mxu0 0
          %614 = vmatprep.subr.bf16.mxu0 0
          %615 = vmatpush1.bf16.msra.mxu0 0
          %616 = vmatprep.subr.bf16.mxu0 0
          %617 = vmatpush1.bf16.msra.mxu0 0
          %618 = vmatprep.subr.bf16.mxu0 0
          %619 = vmatpush1.bf16.msra.mxu0 0
          %620 = vmatprep.mubr.bf16.mxu0 0
          %621 = vmatmul.mubr.bf16.gmra.mrb[0].mxu0 %v565
          %v622 = vpop.f32.mrb[0].mxu0
          %v623 = vadd.f32 %v549, %v622
          %v624 = vpop.f32.mrb[0].mxu0
          %v625 = vpop.f32.mrb[0].mxu0
          %v626 = vadd.f32 %v549, %v625
          %v627 = vpop.f32.mrb[0].mxu0
          %628 = vmatprep.mubr.bf16.mxu0 0
          %629 = vmatmul.mubr.bf16.gmra.mrb[0].mxu0 %v568
          %v630 = vpop.f32.mrb[0].mxu0
          %v631 = vadd.f32 %v549, %v630
          %v632 = vpop.f32.mrb[0].mxu0
          %v633 = vpop.f32.mrb[0].mxu0
          %v634 = vadd.f32 %v549, %v633
          %v635 = vpop.f32.mrb[0].mxu0
          %636 = vmatprep.mubr.bf16.mxu0 0
          %637 = vmatmul.mubr.bf16.gmra.mrb[0].mxu0 %v571
          %v638 = vpop.f32.mrb[0].mxu0
          %v639 = vadd.f32 %v549, %v638
          %v640 = vpop.f32.mrb[0].mxu0
          %v641 = vpop.f32.mrb[0].mxu0
          %v642 = vadd.f32 %v549, %v641
          %v643 = vpop.f32.mrb[0].mxu0
          %644 = vmatprep.mubr.bf16.mxu0 0
          %645 = vmatmul.mubr.bf16.gmra.mrb[0].mxu0 %v574
          %v646 = vpop.f32.mrb[0].mxu0
          %v647 = vadd.f32 %v549, %v646
          %v648 = vpop.f32.mrb[0].mxu0
          %v649 = vpop.f32.mrb[0].mxu0
          %v650 = vadd.f32 %v549, %v649
          %v651 = vpop.f32.mrb[0].mxu0
          %652 = vmatprep.mubr.bf16.mxu0 0
          %653 = vmatmul.mubr.bf16.gmra.mrb[0].mxu0 %v577
          %v654 = vpop.f32.mrb[0].mxu0
          %v655 = vadd.f32 %v549, %v654
          %v656 = vpop.f32.mrb[0].mxu0
          %v657 = vpop.f32.mrb[0].mxu0
          %v658 = vadd.f32 %v549, %v657
          %v659 = vpop.f32.mrb[0].mxu0
          %660 = vmatprep.mubr.bf16.mxu0 0
          %661 = vmatmul.mubr.bf16.gmra.mrb[0].mxu0 %v580
          %v662 = vpop.f32.mrb[0].mxu0
          %v663 = vadd.f32 %v549, %v662
          %v664 = vpop.f32.mrb[0].mxu0
          %v665 = vpop.f32.mrb[0].mxu0
          %v666 = vadd.f32 %v549, %v665
          %v667 = vpop.f32.mrb[0].mxu0
          %668 = vmatprep.mubr.bf16.mxu0 0
          %669 = vmatmul.mubr.bf16.gmra.mrb[0].mxu0 %v583
          %v670 = vpop.f32.mrb[0].mxu0
          %v671 = vadd.f32 %v549, %v670
          %v672 = vpop.f32.mrb[0].mxu0
          %v673 = vpop.f32.mrb[0].mxu0
          %v674 = vadd.f32 %v549, %v673
          %v675 = vpop.f32.mrb[0].mxu0
          %676 = vmatprep.mubr.bf16.mxu0 0
          %677 = vmatmul.mubr.bf16.gmra.mrb[0].mxu0 %v586
          %v678 = vpop.f32.mrb[0].mxu0
          %v679 = vadd.f32 %v549, %v678
          %v680 = vpop.f32.mrb[0].mxu0
          %v681 = vpop.f32.mrb[0].mxu0
          %v682 = vadd.f32 %v549, %v681
          %v683 = vpop.f32.mrb[0].mxu0
          %684 = vdwg.mxu0
          %v685 = vpack.c.bf16 %v626, %v623
          %v686 = vpack.c.bf16 %v634, %v631
          %v687 = vpack.c.bf16 %v642, %v639
          %v688 = vpack.c.bf16 %v650, %v647
          %v689 = vpack.c.bf16 %v658, %v655
          %v690 = vpack.c.bf16 %v666, %v663
          %v691 = vpack.c.bf16 %v674, %v671
          %v692 = vpack.c.bf16 %v682, %v679
          %693 = vst.msk [vmem:[#allocation2] sm:$0xff] %vm563, %v685
          %694 = vst.msk [vmem:[#allocation2 + $0x8] sm:$0xff] %vm563, %v686
          %695 = vst.msk [vmem:[#allocation2 + $0x10] sm:$0xff] %vm563, %v687
          %696 = vst.msk [vmem:[#allocation2 + $0x18] sm:$0xff] %vm563, %v688
          %697 = vst.msk [vmem:[#allocation2 + $0x20] sm:$0xff] %vm563, %v689
          %698 = vst.msk [vmem:[#allocation2 + $0x28] sm:$0xff] %vm563, %v690
          %699 = vst.msk [vmem:[#allocation2 + $0x30] sm:$0xff] %vm563, %v691
          %700 = vst.msk [vmem:[#allocation2 + $0x38] sm:$0xff] %vm563, %v692
          %v701 = vld [vmem:[%s5] sm:$0xf]
          %v702 = vld [vmem:[%s5 + $0x4] sm:$0xf]
          %v703 = vld [vmem:[%s5 + $0x8] sm:$0xf]
          %v704 = vld [vmem:[%s5 + $0xc] sm:$0xf]
          %v705 = vld [vmem:[%s9] sm:$0x1]
          %v707 = vlaneseq
          %v708 = vshrl.u32 %v707, 7
          %v709 = vsub.s32 0, %v708
          %v710 = vrot.slane %v705, %v709
          %v716 = vunpack.c.l.b16 %v701
          %v717 = vunpack.c.l.b16 %v702
          %v718 = vunpack.c.l.b16 %v703
          %v719 = vunpack.c.l.b16 %v704
          %v720 = vpack.c.b16 %v717, %v716
          %v721 = vpack.c.b16 %v719, %v718
          %v725 = vsel %vm563, %v532, 0
          %v728 = vsel %vm563, %v533, 0
          %v731 = vsel %vm563, %v534, 0
          %v734 = vsel %vm563, %v535, 0
          %v737 = vsel %vm563, %v536, 0
          %v740 = vsel %vm563, %v537, 0
          %v743 = vsel %vm563, %v538, 0
          %v746 = vsel %vm563, %v539, 0
          %748 = vmatprep.subr.bf16.mxu0 0
          %749 = vmatpush1.bf16.msra.mxu0 %v720
          %750 = vmatprep.subr.bf16.mxu0 0
          %751 = vmatpush1.bf16.msra.mxu0 %v721
          %752 = vmatprep.subr.bf16.mxu0 0
          %753 = vmatpush1.bf16.msra.mxu0 0
          %754 = vmatprep.subr.bf16.mxu0 0
          %755 = vmatpush1.bf16.msra.mxu0 0
          %756 = vmatprep.subr.bf16.mxu0 0
          %757 = vmatpush1.bf16.msra.mxu0 0
          %758 = vmatprep.subr.bf16.mxu0 0
          %759 = vmatpush1.bf16.msra.mxu0 0
          %760 = vmatprep.subr.bf16.mxu0 0
          %761 = vmatpush1.bf16.msra.mxu0 0
          %762 = vmatprep.subr.bf16.mxu0 0
          %763 = vmatpush1.bf16.msra.mxu0 0
          %764 = vmatprep.subr.bf16.mxu0 0
          %765 = vmatpush1.bf16.msra.mxu0 0
          %766 = vmatprep.subr.bf16.mxu0 0
          %767 = vmatpush1.bf16.msra.mxu0 0
          %768 = vmatprep.subr.bf16.mxu0 0
          %769 = vmatpush1.bf16.msra.mxu0 0
          %770 = vmatprep.subr.bf16.mxu0 0
          %771 = vmatpush1.bf16.msra.mxu0 0
          %772 = vmatprep.subr.bf16.mxu0 0
          %773 = vmatpush1.bf16.msra.mxu0 0
          %774 = vmatprep.subr.bf16.mxu0 0
          %775 = vmatpush1.bf16.msra.mxu0 0
          %776 = vmatprep.subr.bf16.mxu0 0
          %777 = vmatpush1.bf16.msra.mxu0 0
          %778 = vmatprep.subr.bf16.mxu0 0
          %779 = vmatpush1.bf16.msra.mxu0 0
          %780 = vmatprep.mubr.bf16.mxu0 0
          %781 = vmatmul.mubr.bf16.gmra.mrb[0].mxu0 %v725
          %v782 = vpop.f32.mrb[0].mxu0
          %v783 = vadd.f32 %v710, %v782
          %v784 = vpop.f32.mrb[0].mxu0
          %v785 = vpop.f32.mrb[0].mxu0
          %v786 = vadd.f32 %v710, %v785
          %v787 = vpop.f32.mrb[0].mxu0
          %788 = vmatprep.mubr.bf16.mxu0 0
          %789 = vmatmul.mubr.bf16.gmra.mrb[0].mxu0 %v728
          %v790 = vpop.f32.mrb[0].mxu0
          %v791 = vadd.f32 %v710, %v790
          %v792 = vpop.f32.mrb[0].mxu0
          %v793 = vpop.f32.mrb[0].mxu0
          %v794 = vadd.f32 %v710, %v793
          %v795 = vpop.f32.mrb[0].mxu0
          %796 = vmatprep.mubr.bf16.mxu0 0
          %797 = vmatmul.mubr.bf16.gmra.mrb[0].mxu0 %v731
          %v798 = vpop.f32.mrb[0].mxu0
          %v799 = vadd.f32 %v710, %v798
          %v800 = vpop.f32.mrb[0].mxu0
          %v801 = vpop.f32.mrb[0].mxu0
          %v802 = vadd.f32 %v710, %v801
          %v803 = vpop.f32.mrb[0].mxu0
          %804 = vmatprep.mubr.bf16.mxu0 0
          %805 = vmatmul.mubr.bf16.gmra.mrb[0].mxu0 %v734
          %v806 = vpop.f32.mrb[0].mxu0
          %v807 = vadd.f32 %v710, %v806
          %v808 = vpop.f32.mrb[0].mxu0
          %v809 = vpop.f32.mrb[0].mxu0
          %v810 = vadd.f32 %v710, %v809
          %v811 = vpop.f32.mrb[0].mxu0
          %812 = vmatprep.mubr.bf16.mxu0 0
          %813 = vmatmul.mubr.bf16.gmra.mrb[0].mxu0 %v737
          %v814 = vpop.f32.mrb[0].mxu0
          %v815 = vadd.f32 %v710, %v814
          %v816 = vpop.f32.mrb[0].mxu0
          %v817 = vpop.f32.mrb[0].mxu0
          %v818 = vadd.f32 %v710, %v817
          %v819 = vpop.f32.mrb[0].mxu0
          %820 = vmatprep.mubr.bf16.mxu0 0
          %821 = vmatmul.mubr.bf16.gmra.mrb[0].mxu0 %v740
          %v822 = vpop.f32.mrb[0].mxu0
          %v823 = vadd.f32 %v710, %v822
          %v824 = vpop.f32.mrb[0].mxu0
          %v825 = vpop.f32.mrb[0].mxu0
          %v826 = vadd.f32 %v710, %v825
          %v827 = vpop.f32.mrb[0].mxu0
          %828 = vmatprep.mubr.bf16.mxu0 0
          %829 = vmatmul.mubr.bf16.gmra.mrb[0].mxu0 %v743
          %v830 = vpop.f32.mrb[0].mxu0
          %v831 = vadd.f32 %v710, %v830
          %v832 = vpop.f32.mrb[0].mxu0
          %v833 = vpop.f32.mrb[0].mxu0
          %v834 = vadd.f32 %v710, %v833
          %v835 = vpop.f32.mrb[0].mxu0
          %836 = vmatprep.mubr.bf16.mxu0 0
          %837 = vmatmul.mubr.bf16.gmra.mrb[0].mxu0 %v746
          %v838 = vpop.f32.mrb[0].mxu0
          %v839 = vadd.f32 %v710, %v838
          %v840 = vpop.f32.mrb[0].mxu0
          %v841 = vpop.f32.mrb[0].mxu0
          %v842 = vadd.f32 %v710, %v841
          %v843 = vpop.f32.mrb[0].mxu0
          %844 = vdwg.mxu0
          %v845 = vpack.c.bf16 %v786, %v783
          %v846 = vpack.c.bf16 %v794, %v791
          %v847 = vpack.c.bf16 %v802, %v799
          %v848 = vpack.c.bf16 %v810, %v807
          %v849 = vpack.c.bf16 %v818, %v815
          %v850 = vpack.c.bf16 %v826, %v823
          %v851 = vpack.c.bf16 %v834, %v831
          %v852 = vpack.c.bf16 %v842, %v839
          %853 = vst.msk [vmem:[#allocation3] sm:$0xff] %vm563, %v845
          %854 = vst.msk [vmem:[#allocation3 + $0x8] sm:$0xff] %vm563, %v846
          %855 = vst.msk [vmem:[#allocation3 + $0x10] sm:$0xff] %vm563, %v847
          %856 = vst.msk [vmem:[#allocation3 + $0x18] sm:$0xff] %vm563, %v848
          %857 = vst.msk [vmem:[#allocation3 + $0x20] sm:$0xff] %vm563, %v849
          %858 = vst.msk [vmem:[#allocation3 + $0x28] sm:$0xff] %vm563, %v850
          %859 = vst.msk [vmem:[#allocation3 + $0x30] sm:$0xff] %vm563, %v851
          %860 = vst.msk [vmem:[#allocation3 + $0x38] sm:$0xff] %vm563, %v852
        $region68: #{tpu_custom_call.1} parent=63 // pred_fallthru
          _
        %v861 = vld [vmem:[%s476] sm:$0xff]
        %v862 = vpack.c.bf16 %v861, %v861
        %v863 = vld [vmem:[%s3] sm:$0xf]
        %v864 = vld [vmem:[%s3 + $0x4] sm:$0xf]
        %v865 = vld [vmem:[%s3 + $0x8] sm:$0xf]
        %v866 = vld [vmem:[%s3 + $0xc] sm:$0xf]
        %v867 = vld [vmem:[%s7] sm:$0x1]
        %v869 = vlaneseq
        %v870 = vshrl.u32 %v869, 7
        %v871 = vsub.s32 0, %v870
        %v872 = vrot.slane %v867, %v871
        %v878 = vunpack.c.l.b16 %v863
        %v879 = vunpack.c.l.b16 %v864
        %v880 = vunpack.c.l.b16 %v865
        %v881 = vunpack.c.l.b16 %v866
        %v882 = vpack.c.b16 %v879, %v878
        %v883 = vpack.c.b16 %v881, %v880
        %vm886 = vcmask 261120
        %v888 = vsel %vm886, %v862, 0
        %890 = vmatprep.subr.bf16.mxu0 0
        %891 = vmatpush1.bf16.msra.mxu0 %v882
        %892 = vmatprep.subr.bf16.mxu0 0
        %893 = vmatpush1.bf16.msra.mxu0 %v883
        %894 = vmatprep.subr.bf16.mxu0 0
        %895 = vmatpush1.bf16.msra.mxu0 0
        %896 = vmatprep.subr.bf16.mxu0 0
        %897 = vmatpush1.bf16.msra.mxu0 0
        %898 = vmatprep.subr.bf16.mxu0 0
        %899 = vmatpush1.bf16.msra.mxu0 0
        %900 = vmatprep.subr.bf16.mxu0 0
        %901 = vmatpush1.bf16.msra.mxu0 0
        %902 = vmatprep.subr.bf16.mxu0 0
        %903 = vmatpush1.bf16.msra.mxu0 0
        %904 = vmatprep.subr.bf16.mxu0 0
        %905 = vmatpush1.bf16.msra.mxu0 0
        %906 = vmatprep.subr.bf16.mxu0 0
        %907 = vmatpush1.bf16.msra.mxu0 0
        %908 = vmatprep.subr.bf16.mxu0 0
        %909 = vmatpush1.bf16.msra.mxu0 0
        %910 = vmatprep.subr.bf16.mxu0 0
        %911 = vmatpush1.bf16.msra.mxu0 0
        %912 = vmatprep.subr.bf16.mxu0 0
        %913 = vmatpush1.bf16.msra.mxu0 0
        %914 = vmatprep.subr.bf16.mxu0 0
        %915 = vmatpush1.bf16.msra.mxu0 0
        %916 = vmatprep.subr.bf16.mxu0 0
        %917 = vmatpush1.bf16.msra.mxu0 0
        %918 = vmatprep.subr.bf16.mxu0 0
        %919 = vmatpush1.bf16.msra.mxu0 0
        %920 = vmatprep.subr.bf16.mxu0 0
        %921 = vmatpush1.bf16.msra.mxu0 0
        %922 = vmatprep.mubr.bf16.mxu0 0
        %923 = vmatmul.mubr.bf16.gmra.mrb[0].mxu0 %v888
        %v924 = vpop.f32.mrb[0].mxu0
        %v925 = vadd.f32 %v872, %v924
        %v926 = vpop.f32.mrb[0].mxu0
        %v927 = vpop.f32.mrb[0].mxu0
        %v928 = vpop.f32.mrb[0].mxu0
        %929 = vdwg.mxu0
        %v930 = vpack.c.bf16 %v925, %v925
        %v931 = vld [vmem:[#allocation2] sm:$0xff]
        %v932 = vld [vmem:[#allocation2 + $0x8] sm:$0xff]
        %v933 = vld [vmem:[#allocation2 + $0x10] sm:$0xff]
        %v934 = vld [vmem:[#allocation2 + $0x18] sm:$0xff]
        %v935 = vld [vmem:[#allocation2 + $0x20] sm:$0xff]
        %v936 = vld [vmem:[#allocation2 + $0x28] sm:$0xff]
        %v937 = vld [vmem:[#allocation2 + $0x30] sm:$0xff]
        %v938 = vld [vmem:[#allocation2 + $0x38] sm:$0xff]
        %v939 = vld [vmem:[#allocation3] sm:$0xff]
        %v940 = vld [vmem:[#allocation3 + $0x8] sm:$0xff]
        %v941 = vld [vmem:[#allocation3 + $0x10] sm:$0xff]
        %v942 = vld [vmem:[#allocation3 + $0x18] sm:$0xff]
        %v943 = vld [vmem:[#allocation3 + $0x20] sm:$0xff]
        %v944 = vld [vmem:[#allocation3 + $0x28] sm:$0xff]
        %v945 = vld [vmem:[#allocation3 + $0x30] sm:$0xff]
        %v946 = vld [vmem:[#allocation3 + $0x38] sm:$0xff]
        %v947 = vlaneseq
        %v948 = vand.u32 %v947, 127
        %vm949 = vcmp.lt.s32.totalorder %v948, 8
        %v950 = vsel %vm949, 0.0, -1e+30
        %vm951 = vcmask 64512
        %v953 = vsel %vm951, %v930, 0
        %v956 = vsel %vm951, %v931, 0
        %v959 = vsel %vm951, %v932, 0
        %v962 = vsel %vm951, %v933, 0
        %v965 = vsel %vm951, %v934, 0
        %v968 = vsel %vm951, %v935, 0
        %v971 = vsel %vm951, %v936, 0
        %v974 = vsel %vm951, %v937, 0
        %v977 = vsel %vm951, %v938, 0
        %979 = vmatprep.subr.bf16.mxu0 0
        %980 = vmatpush1.bf16.xpose.msra.mxu0 %v956
        %981 = vmatprep.subr.bf16.mxu0 0
        %982 = vmatpush1.bf16.xpose.msra.mxu0 %v959
        %983 = vmatprep.subr.bf16.mxu0 0
        %984 = vmatpush1.bf16.xpose.msra.mxu0 %v962
        %985 = vmatprep.subr.bf16.mxu0 0
        %986 = vmatpush1.bf16.xpose.msra.mxu0 %v965
        %987 = vmatprep.subr.bf16.mxu0 0
        %988 = vmatpush1.bf16.xpose.msra.mxu0 %v968
        %989 = vmatprep.subr.bf16.mxu0 0
        %990 = vmatpush1.bf16.xpose.msra.mxu0 %v971
        %991 = vmatprep.subr.bf16.mxu0 0
        %992 = vmatpush1.bf16.xpose.msra.mxu0 %v974
        %993 = vmatprep.subr.bf16.mxu0 0
        %994 = vmatpush1.bf16.xpose.msra.mxu0 %v977
        %995 = vmatprep.subr.bf16.mxu0 0
        %996 = vmatpush1.bf16.xpose.msra.mxu0 0
        %997 = vmatprep.subr.bf16.mxu0 0
        %998 = vmatpush1.bf16.xpose.msra.mxu0 0
        %999 = vmatprep.subr.bf16.mxu0 0
        %1000 = vmatpush1.bf16.xpose.msra.mxu0 0
        %1001 = vmatprep.subr.bf16.mxu0 0
        %1002 = vmatpush1.bf16.xpose.msra.mxu0 0
        %1003 = vmatprep.subr.bf16.mxu0 0
        %1004 = vmatpush1.bf16.xpose.msra.mxu0 0
        %1005 = vmatprep.subr.bf16.mxu0 0
        %1006 = vmatpush1.bf16.xpose.msra.mxu0 0
        %1007 = vmatprep.subr.bf16.mxu0 0
        %1008 = vmatpush1.bf16.xpose.msra.mxu0 0
        %1009 = vmatprep.subr.bf16.mxu0 0
        %1010 = vmatpush1.bf16.xpose.msra.mxu0 0
        %1011 = vmatprep.mubr.bf16.mxu0 0
        %1012 = vmatmul.mubr.bf16.gmra.mrb[0].mxu0 %v953
        %v1013 = vpop.f32.mrb[0].mxu0
        %v1014 = vadd.f32 %v950, %v1013
        %v1015 = vpop.f32.mrb[0].mxu0
        %v1016 = vpop.f32.mrb[0].mxu0
        %v1017 = vpop.f32.mrb[0].mxu0
        %1018 = vdwg.mxu0
        %1019 = vmax.xlane.f32.xlu0 %v1014
        %v1020 = vpop.xlane.xlu0 %1019
        %v1021 = vsub.f32 %v1014, %v1020
        %v1022 = vmul.f32 %v1021, 1.442695
        %v1023 = vpow.pop %v1022
        %1024 = vadd.xlane.f32.xlu0 %v1023
        %v1025 = vpop.xlane.xlu0 %1024
        %v1026 = vrcp.pop %v1025
        %v1027 = vmul.f32 %v1023, %v1026
        %1028 = vst [vmem:[%s469] sm:$0xff] %v1027
        %v1029 = vpack.c.bf16 %v1027, %v1027
        %1030 = vmatprep.subr.bf16.mxu0 0
        %1031 = vmatpush1.bf16.msra.mxu0 %v939
        %1032 = vmatprep.subr.bf16.mxu0 0
        %1033 = vmatpush1.bf16.msra.mxu0 %v940
        %1034 = vmatprep.subr.bf16.mxu0 0
        %1035 = vmatpush1.bf16.msra.mxu0 %v941
        %1036 = vmatprep.subr.bf16.mxu0 0
        %1037 = vmatpush1.bf16.msra.mxu0 %v942
        %1038 = vmatprep.subr.bf16.mxu0 0
        %1039 = vmatpush1.bf16.msra.mxu0 %v943
        %1040 = vmatprep.subr.bf16.mxu0 0
        %1041 = vmatpush1.bf16.msra.mxu0 %v944
        %1042 = vmatprep.subr.bf16.mxu0 0
        %1043 = vmatpush1.bf16.msra.mxu0 %v945
        %1044 = vmatprep.subr.bf16.mxu0 0
        %1045 = vmatpush1.bf16.msra.mxu0 %v946
        %1046 = vmatprep.subr.bf16.mxu0 0
        %1047 = vmatpush1.bf16.msra.mxu0 0
        %1048 = vmatprep.subr.bf16.mxu0 0
        %1049 = vmatpush1.bf16.msra.mxu0 0
        %1050 = vmatprep.subr.bf16.mxu0 0
        %1051 = vmatpush1.bf16.msra.mxu0 0
        %1052 = vmatprep.subr.bf16.mxu0 0
        %1053 = vmatpush1.bf16.msra.mxu0 0
        %1054 = vmatprep.subr.bf16.mxu0 0
        %1055 = vmatpush1.bf16.msra.mxu0 0
        %1056 = vmatprep.subr.bf16.mxu0 0
        %1057 = vmatpush1.bf16.msra.mxu0 0
        %1058 = vmatprep.subr.bf16.mxu0 0
        %1059 = vmatpush1.bf16.msra.mxu0 0
        %1060 = vmatprep.subr.bf16.mxu0 0
        %1061 = vmatpush1.bf16.msra.mxu0 0
        %1062 = vmatprep.mubr.bf16.mxu0 0
        %1063 = vmatmul.mubr.bf16.gmra.mrb[0].mxu0 %v1029
        %v1064 = vpop.f32.mrb[0].mxu0
        %v1065 = vadd.f32 0.0, %v1064
        %v1066 = vpop.f32.mrb[0].mxu0
        %v1067 = vpop.f32.mrb[0].mxu0
        %v1068 = vpop.f32.mrb[0].mxu0
        %1069 = vdwg.mxu0
        %v1070 = vpack.c.bf16 %v1065, %v1065
        %vm1071 = vcmask 60416
        %1072 = vst.msk [vmem:[#allocation4] sm:$0xf] %vm1071, %v1070
        %1074 = vrot.lane.b32.xlu0 %v930, 120
        %v1075 = vpop.permute.xlu0 %1074
        %1084 = vrot.lane.b32.xlu0 %v931, 120
        %v1085 = vpop.permute.xlu0 %1084
        %1086 = vrot.lane.b32.xlu0 %v932, 120
        %v1087 = vpop.permute.xlu0 %1086
        %1088 = vrot.lane.b32.xlu0 %v933, 120
        %v1089 = vpop.permute.xlu0 %1088
        %1090 = vrot.lane.b32.xlu0 %v934, 120
        %v1091 = vpop.permute.xlu0 %1090
        %1092 = vrot.lane.b32.xlu0 %v935, 120
        %v1093 = vpop.permute.xlu0 %1092
        %1094 = vrot.lane.b32.xlu0 %v936, 120
        %v1095 = vpop.permute.xlu0 %1094
        %1096 = vrot.lane.b32.xlu0 %v937, 120
        %v1097 = vpop.permute.xlu0 %1096
        %1098 = vrot.lane.b32.xlu0 %v938, 120
        %v1099 = vpop.permute.xlu0 %1098
        %v1101 = vsel %vm951, %v1075, 0
        %v1104 = vsel %vm951, %v1085, 0
        %v1107 = vsel %vm951, %v1087, 0
        %v1110 = vsel %vm951, %v1089, 0
        %v1113 = vsel %vm951, %v1091, 0
        %v1116 = vsel %vm951, %v1093, 0
        %v1119 = vsel %vm951, %v1095, 0
        %v1122 = vsel %vm951, %v1097, 0
        %v1125 = vsel %vm951, %v1099, 0
        %1127 = vmatprep.subr.bf16.mxu0 0
        %1128 = vmatpush1.bf16.xpose.msra.mxu0 %v1104
        %1129 = vmatprep.subr.bf16.mxu0 0
        %1130 = vmatpush1.bf16.xpose.msra.mxu0 %v1107
        %1131 = vmatprep.subr.bf16.mxu0 0
        %1132 = vmatpush1.bf16.xpose.msra.mxu0 %v1110
        %1133 = vmatprep.subr.bf16.mxu0 0
        %1134 = vmatpush1.bf16.xpose.msra.mxu0 %v1113
        %1135 = vmatprep.subr.bf16.mxu0 0
        %1136 = vmatpush1.bf16.xpose.msra.mxu0 %v1116
        %1137 = vmatprep.subr.bf16.mxu0 0
        %1138 = vmatpush1.bf16.xpose.msra.mxu0 %v1119
        %1139 = vmatprep.subr.bf16.mxu0 0
        %1140 = vmatpush1.bf16.xpose.msra.mxu0 %v1122
        %1141 = vmatprep.subr.bf16.mxu0 0
        %1142 = vmatpush1.bf16.xpose.msra.mxu0 %v1125
        %1143 = vmatprep.subr.bf16.mxu0 0
        %1144 = vmatpush1.bf16.xpose.msra.mxu0 0
        %1145 = vmatprep.subr.bf16.mxu0 0
        %1146 = vmatpush1.bf16.xpose.msra.mxu0 0
        %1147 = vmatprep.subr.bf16.mxu0 0
        %1148 = vmatpush1.bf16.xpose.msra.mxu0 0
        %1149 = vmatprep.subr.bf16.mxu0 0
        %1150 = vmatpush1.bf16.xpose.msra.mxu0 0
        %1151 = vmatprep.subr.bf16.mxu0 0
        %1152 = vmatpush1.bf16.xpose.msra.mxu0 0
        %1153 = vmatprep.subr.bf16.mxu0 0
        %1154 = vmatpush1.bf16.xpose.msra.mxu0 0
        %1155 = vmatprep.subr.bf16.mxu0 0
        %1156 = vmatpush1.bf16.xpose.msra.mxu0 0
        %1157 = vmatprep.subr.bf16.mxu0 0
        %1158 = vmatpush1.bf16.xpose.msra.mxu0 0
        %1159 = vmatprep.mubr.bf16.mxu0 0
        %1160 = vmatmul.mubr.bf16.gmra.mrb[0].mxu0 %v1101
        %v1161 = vpop.f32.mrb[0].mxu0
        %v1162 = vadd.f32 %v950, %v1161
        %v1163 = vpop.f32.mrb[0].mxu0
        %v1164 = vpop.f32.mrb[0].mxu0
        %v1165 = vpop.f32.mrb[0].mxu0
        %1166 = vdwg.mxu0
        %1167 = vmax.xlane.f32.xlu0 %v1162
        %v1168 = vpop.xlane.xlu0 %1167
        %v1169 = vsub.f32 %v1162, %v1168
        %v1170 = vmul.f32 %v1169, 1.442695
        %v1171 = vpow.pop %v1170
        %1172 = vadd.xlane.f32.xlu0 %v1171
        %v1173 = vpop.xlane.xlu0 %1172
        %v1174 = vrcp.pop %v1173
        %v1175 = vmul.f32 %v1171, %v1174
        %v1176 = vld [vmem:[%s469] sm:$0xff]
        %v1177 = vadd.f32 %v1176, %v1175
        %1178 = vst [vmem:[%s469] sm:$0xff] %v1177
        %v1179 = vpack.c.bf16 %v1175, %v1175
        %1188 = vrot.lane.b32.xlu0 %v939, 120
        %v1189 = vpop.permute.xlu0 %1188
        %1190 = vrot.lane.b32.xlu0 %v940, 120
        %v1191 = vpop.permute.xlu0 %1190
        %1192 = vrot.lane.b32.xlu0 %v941, 120
        %v1193 = vpop.permute.xlu0 %1192
        %1194 = vrot.lane.b32.xlu0 %v942, 120
        %v1195 = vpop.permute.xlu0 %1194
        %1196 = vrot.lane.b32.xlu0 %v943, 120
        %v1197 = vpop.permute.xlu0 %1196
        %1198 = vrot.lane.b32.xlu0 %v944, 120
        %v1199 = vpop.permute.xlu0 %1198
        %1200 = vrot.lane.b32.xlu0 %v945, 120
        %v1201 = vpop.permute.xlu0 %1200
        %1202 = vrot.lane.b32.xlu0 %v946, 120
        %v1203 = vpop.permute.xlu0 %1202
        %1212 = vmatprep.subr.bf16.mxu0 0
        %1213 = vmatpush1.bf16.msra.mxu0 %v1189
        %1214 = vmatprep.subr.bf16.mxu0 0
        %1215 = vmatpush1.bf16.msra.mxu0 %v1191
        %1216 = vmatprep.subr.bf16.mxu0 0
        %1217 = vmatpush1.bf16.msra.mxu0 %v1193
        %1218 = vmatprep.subr.bf16.mxu0 0
        %1219 = vmatpush1.bf16.msra.mxu0 %v1195
        %1220 = vmatprep.subr.bf16.mxu0 0
        %1221 = vmatpush1.bf16.msra.mxu0 %v1197
        %1222 = vmatprep.subr.bf16.mxu0 0
        %1223 = vmatpush1.bf16.msra.mxu0 %v1199
        %1224 = vmatprep.subr.bf16.mxu0 0
        %1225 = vmatpush1.bf16.msra.mxu0 %v1201
        %1226 = vmatprep.subr.bf16.mxu0 0
        %1227 = vmatpush1.bf16.msra.mxu0 %v1203
        %1228 = vmatprep.subr.bf16.mxu0 0
        %1229 = vmatpush1.bf16.msra.mxu0 0
        %1230 = vmatprep.subr.bf16.mxu0 0
        %1231 = vmatpush1.bf16.msra.mxu0 0
        %1232 = vmatprep.subr.bf16.mxu0 0
        %1233 = vmatpush1.bf16.msra.mxu0 0
        %1234 = vmatprep.subr.bf16.mxu0 0
        %1235 = vmatpush1.bf16.msra.mxu0 0
        %1236 = vmatprep.subr.bf16.mxu0 0
        %1237 = vmatpush1.bf16.msra.mxu0 0
        %1238 = vmatprep.subr.bf16.mxu0 0
        %1239 = vmatpush1.bf16.msra.mxu0 0
        %1240 = vmatprep.subr.bf16.mxu0 0
        %1241 = vmatpush1.bf16.msra.mxu0 0
        %1242 = vmatprep.subr.bf16.mxu0 0
        %1243 = vmatpush1.bf16.msra.mxu0 0
        %1244 = vmatprep.mubr.bf16.mxu0 0
        %1245 = vmatmul.mubr.bf16.gmra.mrb[0].mxu0 %v1179
        %v1246 = vpop.f32.mrb[0].mxu0
        %v1247 = vadd.f32 0.0, %v1246
        %v1248 = vpop.f32.mrb[0].mxu0
        %v1249 = vpop.f32.mrb[0].mxu0
        %v1250 = vpop.f32.mrb[0].mxu0
        %1251 = vdwg.mxu0
        %v1252 = vpack.c.bf16 %v1247, %v1247
        %v1254 = vunpack.c.l.b16 %v1252
        %v1255 = vpack.c.b16 %v1254, %v1254
        %1256 = vrot.lane.b32.xlu0 %v1255, 8
        %v1257 = vpop.permute.xlu0 %1256
        %vm1259 = vcmask 126016
        %1260 = vst.msk [vmem:[#allocation4] sm:$0xf] %vm1259, %v1257
        %1261 = vrot.lane.b32.xlu0 %v930, 112
        %v1262 = vpop.permute.xlu0 %1261
        %1263 = vrot.lane.b32.xlu0 %v931, 112
        %v1264 = vpop.permute.xlu0 %1263
        %1265 = vrot.lane.b32.xlu0 %v932, 112
        %v1266 = vpop.permute.xlu0 %1265
        %1267 = vrot.lane.b32.xlu0 %v933, 112
        %v1268 = vpop.permute.xlu0 %1267
        %1269 = vrot.lane.b32.xlu0 %v934, 112
        %v1270 = vpop.permute.xlu0 %1269
        %1271 = vrot.lane.b32.xlu0 %v935, 112
        %v1272 = vpop.permute.xlu0 %1271
        %1273 = vrot.lane.b32.xlu0 %v936, 112
        %v1274 = vpop.permute.xlu0 %1273
        %1275 = vrot.lane.b32.xlu0 %v937, 112
        %v1276 = vpop.permute.xlu0 %1275
        %1277 = vrot.lane.b32.xlu0 %v938, 112
        %v1278 = vpop.permute.xlu0 %1277
        %v1280 = vsel %vm951, %v1262, 0
        %v1283 = vsel %vm951, %v1264, 0
        %v1286 = vsel %vm951, %v1266, 0
        %v1289 = vsel %vm951, %v1268, 0
        %v1292 = vsel %vm951, %v1270, 0
        %v1295 = vsel %vm951, %v1272, 0
        %v1298 = vsel %vm951, %v1274, 0
        %v1301 = vsel %vm951, %v1276, 0
        %v1304 = vsel %vm951, %v1278, 0
        %1306 = vmatprep.subr.bf16.mxu0 0
        %1307 = vmatpush1.bf16.xpose.msra.mxu0 %v1283
        %1308 = vmatprep.subr.bf16.mxu0 0
        %1309 = vmatpush1.bf16.xpose.msra.mxu0 %v1286
        %1310 = vmatprep.subr.bf16.mxu0 0
        %1311 = vmatpush1.bf16.xpose.msra.mxu0 %v1289
        %1312 = vmatprep.subr.bf16.mxu0 0
        %1313 = vmatpush1.bf16.xpose.msra.mxu0 %v1292
        %1314 = vmatprep.subr.bf16.mxu0 0
        %1315 = vmatpush1.bf16.xpose.msra.mxu0 %v1295
        %1316 = vmatprep.subr.bf16.mxu0 0
        %1317 = vmatpush1.bf16.xpose.msra.mxu0 %v1298
        %1318 = vmatprep.subr.bf16.mxu0 0
        %1319 = vmatpush1.bf16.xpose.msra.mxu0 %v1301
        %1320 = vmatprep.subr.bf16.mxu0 0
        %1321 = vmatpush1.bf16.xpose.msra.mxu0 %v1304
        %1322 = vmatprep.subr.bf16.mxu0 0
        %1323 = vmatpush1.bf16.xpose.msra.mxu0 0
        %1324 = vmatprep.subr.bf16.mxu0 0
        %1325 = vmatpush1.bf16.xpose.msra.mxu0 0
        %1326 = vmatprep.subr.bf16.mxu0 0
        %1327 = vmatpush1.bf16.xpose.msra.mxu0 0
        %1328 = vmatprep.subr.bf16.mxu0 0
        %1329 = vmatpush1.bf16.xpose.msra.mxu0 0
        %1330 = vmatprep.subr.bf16.mxu0 0
        %1331 = vmatpush1.bf16.xpose.msra.mxu0 0
        %1332 = vmatprep.subr.bf16.mxu0 0
        %1333 = vmatpush1.bf16.xpose.msra.mxu0 0
        %1334 = vmatprep.subr.bf16.mxu0 0
        %1335 = vmatpush1.bf16.xpose.msra.mxu0 0
        %1336 = vmatprep.subr.bf16.mxu0 0
        %1337 = vmatpush1.bf16.xpose.msra.mxu0 0
        %1338 = vmatprep.mubr.bf16.mxu0 0
        %1339 = vmatmul.mubr.bf16.gmra.mrb[0].mxu0 %v1280
        %v1340 = vpop.f32.mrb[0].mxu0
        %v1341 = vadd.f32 %v950, %v1340
        %v1342 = vpop.f32.mrb[0].mxu0
        %v1343 = vpop.f32.mrb[0].mxu0
        %v1344 = vpop.f32.mrb[0].mxu0
        %1345 = vdwg.mxu0
        %1346 = vmax.xlane.f32.xlu0 %v1341
        %v1347 = vpop.xlane.xlu0 %1346
        %v1348 = vsub.f32 %v1341, %v1347
        %v1349 = vmul.f32 %v1348, 1.442695
        %v1350 = vpow.pop %v1349
        %1351 = vadd.xlane.f32.xlu0 %v1350
        %v1352 = vpop.xlane.xlu0 %1351
        %v1353 = vrcp.pop %v1352
        %v1354 = vmul.f32 %v1350, %v1353
        %v1355 = vld [vmem:[%s469] sm:$0xff]
        %v1356 = vadd.f32 %v1355, %v1354
        %1357 = vst [vmem:[%s469] sm:$0xff] %v1356
        %v1358 = vpack.c.bf16 %v1354, %v1354
        %1359 = vrot.lane.b32.xlu0 %v939, 112
        %v1360 = vpop.permute.xlu0 %1359
        %1361 = vrot.lane.b32.xlu0 %v940, 112
        %v1362 = vpop.permute.xlu0 %1361
        %1363 = vrot.lane.b32.xlu0 %v941, 112
        %v1364 = vpop.permute.xlu0 %1363
        %1365 = vrot.lane.b32.xlu0 %v942, 112
        %v1366 = vpop.permute.xlu0 %1365
        %1367 = vrot.lane.b32.xlu0 %v943, 112
        %v1368 = vpop.permute.xlu0 %1367
        %1369 = vrot.lane.b32.xlu0 %v944, 112
        %v1370 = vpop.permute.xlu0 %1369
        %1371 = vrot.lane.b32.xlu0 %v945, 112
        %v1372 = vpop.permute.xlu0 %1371
        %1373 = vrot.lane.b32.xlu0 %v946, 112
        %v1374 = vpop.permute.xlu0 %1373
        %1383 = vmatprep.subr.bf16.mxu0 0
        %1384 = vmatpush1.bf16.msra.mxu0 %v1360
        %1385 = vmatprep.subr.bf16.mxu0 0
        %1386 = vmatpush1.bf16.msra.mxu0 %v1362
        %1387 = vmatprep.subr.bf16.mxu0 0
        %1388 = vmatpush1.bf16.msra.mxu0 %v1364
        %1389 = vmatprep.subr.bf16.mxu0 0
        %1390 = vmatpush1.bf16.msra.mxu0 %v1366
        %1391 = vmatprep.subr.bf16.mxu0 0
        %1392 = vmatpush1.bf16.msra.mxu0 %v1368
        %1393 = vmatprep.subr.bf16.mxu0 0
        %1394 = vmatpush1.bf16.msra.mxu0 %v1370
        %1395 = vmatprep.subr.bf16.mxu0 0
        %1396 = vmatpush1.bf16.msra.mxu0 %v1372
        %1397 = vmatprep.subr.bf16.mxu0 0
        %1398 = vmatpush1.bf16.msra.mxu0 %v1374
        %1399 = vmatprep.subr.bf16.mxu0 0
        %1400 = vmatpush1.bf16.msra.mxu0 0
        %1401 = vmatprep.subr.bf16.mxu0 0
        %1402 = vmatpush1.bf16.msra.mxu0 0
        %1403 = vmatprep.subr.bf16.mxu0 0
        %1404 = vmatpush1.bf16.msra.mxu0 0
        %1405 = vmatprep.subr.bf16.mxu0 0
        %1406 = vmatpush1.bf16.msra.mxu0 0
        %1407 = vmatprep.subr.bf16.mxu0 0
        %1408 = vmatpush1.bf16.msra.mxu0 0
        %1409 = vmatprep.subr.bf16.mxu0 0
        %1410 = vmatpush1.bf16.msra.mxu0 0
        %1411 = vmatprep.subr.bf16.mxu0 0
        %1412 = vmatpush1.bf16.msra.mxu0 0
        %1413 = vmatprep.subr.bf16.mxu0 0
        %1414 = vmatpush1.bf16.msra.mxu0 0
        %1415 = vmatprep.mubr.bf16.mxu0 0
        %1416 = vmatmul.mubr.bf16.gmra.mrb[0].mxu0 %v1358
        %v1417 = vpop.f32.mrb[0].mxu0
        %v1418 = vadd.f32 0.0, %v1417
        %v1419 = vpop.f32.mrb[0].mxu0
        %v1420 = vpop.f32.mrb[0].mxu0
        %v1421 = vpop.f32.mrb[0].mxu0
        %1422 = vdwg.mxu0
        %v1423 = vpack.c.bf16 %v1418, %v1418
        %v1425 = vunpack.c.l.b16 %v1423
        %v1426 = vpack.c.b16 %v1425, %v1425
        %1427 = vrot.lane.b32.xlu0 %v1426, 16
        %v1428 = vpop.permute.xlu0 %1427
        %vm1430 = vcmask 191616
        %1431 = vst.msk [vmem:[#allocation4] sm:$0xf] %vm1430, %v1428
        %1432 = vrot.lane.b32.xlu0 %v930, 104
        %v1433 = vpop.permute.xlu0 %1432
        %1434 = vrot.lane.b32.xlu0 %v931, 104
        %v1435 = vpop.permute.xlu0 %1434
        %1436 = vrot.lane.b32.xlu0 %v932, 104
        %v1437 = vpop.permute.xlu0 %1436
        %1438 = vrot.lane.b32.xlu0 %v933, 104
        %v1439 = vpop.permute.xlu0 %1438
        %1440 = vrot.lane.b32.xlu0 %v934, 104
        %v1441 = vpop.permute.xlu0 %1440
        %1442 = vrot.lane.b32.xlu0 %v935, 104
        %v1443 = vpop.permute.xlu0 %1442
        %1444 = vrot.lane.b32.xlu0 %v936, 104
        %v1445 = vpop.permute.xlu0 %1444
        %1446 = vrot.lane.b32.xlu0 %v937, 104
        %v1447 = vpop.permute.xlu0 %1446
        %1448 = vrot.lane.b32.xlu0 %v938, 104
        %v1449 = vpop.permute.xlu0 %1448
        %v1451 = vsel %vm951, %v1433, 0
        %v1454 = vsel %vm951, %v1435, 0
        %v1457 = vsel %vm951, %v1437, 0
        %v1460 = vsel %vm951, %v1439, 0
        %v1463 = vsel %vm951, %v1441, 0
        %v1466 = vsel %vm951, %v1443, 0
        %v1469 = vsel %vm951, %v1445, 0
        %v1472 = vsel %vm951, %v1447, 0
        %v1475 = vsel %vm951, %v1449, 0
        %1477 = vmatprep.subr.bf16.mxu0 0
        %1478 = vmatpush1.bf16.xpose.msra.mxu0 %v1454
        %1479 = vmatprep.subr.bf16.mxu0 0
        %1480 = vmatpush1.bf16.xpose.msra.mxu0 %v1457
        %1481 = vmatprep.subr.bf16.mxu0 0
        %1482 = vmatpush1.bf16.xpose.msra.mxu0 %v1460
        %1483 = vmatprep.subr.bf16.mxu0 0
        %1484 = vmatpush1.bf16.xpose.msra.mxu0 %v1463
        %1485 = vmatprep.subr.bf16.mxu0 0
        %1486 = vmatpush1.bf16.xpose.msra.mxu0 %v1466
        %1487 = vmatprep.subr.bf16.mxu0 0
        %1488 = vmatpush1.bf16.xpose.msra.mxu0 %v1469
        %1489 = vmatprep.subr.bf16.mxu0 0
        %1490 = vmatpush1.bf16.xpose.msra.mxu0 %v1472
        %1491 = vmatprep.subr.bf16.mxu0 0
        %1492 = vmatpush1.bf16.xpose.msra.mxu0 %v1475
        %1493 = vmatprep.subr.bf16.mxu0 0
        %1494 = vmatpush1.bf16.xpose.msra.mxu0 0
        %1495 = vmatprep.subr.bf16.mxu0 0
        %1496 = vmatpush1.bf16.xpose.msra.mxu0 0
        %1497 = vmatprep.subr.bf16.mxu0 0
        %1498 = vmatpush1.bf16.xpose.msra.mxu0 0
        %1499 = vmatprep.subr.bf16.mxu0 0
        %1500 = vmatpush1.bf16.xpose.msra.mxu0 0
        %1501 = vmatprep.subr.bf16.mxu0 0
        %1502 = vmatpush1.bf16.xpose.msra.mxu0 0
        %1503 = vmatprep.subr.bf16.mxu0 0
        %1504 = vmatpush1.bf16.xpose.msra.mxu0 0
        %1505 = vmatprep.subr.bf16.mxu0 0
        %1506 = vmatpush1.bf16.xpose.msra.mxu0 0
        %1507 = vmatprep.subr.bf16.mxu0 0
        %1508 = vmatpush1.bf16.xpose.msra.mxu0 0
        %1509 = vmatprep.mubr.bf16.mxu0 0
        %1510 = vmatmul.mubr.bf16.gmra.mrb[0].mxu0 %v1451
        %v1511 = vpop.f32.mrb[0].mxu0
        %v1512 = vadd.f32 %v950, %v1511
        %v1513 = vpop.f32.mrb[0].mxu0
        %v1514 = vpop.f32.mrb[0].mxu0
        %v1515 = vpop.f32.mrb[0].mxu0
        %1516 = vdwg.mxu0
        %1517 = vmax.xlane.f32.xlu0 %v1512
        %v1518 = vpop.xlane.xlu0 %1517
        %v1519 = vsub.f32 %v1512, %v1518
        %v1520 = vmul.f32 %v1519, 1.442695
        %v1521 = vpow.pop %v1520
        %1522 = vadd.xlane.f32.xlu0 %v1521
        %v1523 = vpop.xlane.xlu0 %1522
        %v1524 = vrcp.pop %v1523
        %v1525 = vmul.f32 %v1521, %v1524
        %v1526 = vld [vmem:[%s469] sm:$0xff]
        %v1527 = vadd.f32 %v1526, %v1525
        %1528 = vst [vmem:[%s469] sm:$0xff] %v1527
        %v1529 = vpack.c.bf16 %v1525, %v1525
        %1530 = vrot.lane.b32.xlu0 %v939, 104
        %v1531 = vpop.permute.xlu0 %1530
        %1532 = vrot.lane.b32.xlu0 %v940, 104
        %v1533 = vpop.permute.xlu0 %1532
        %1534 = vrot.lane.b32.xlu0 %v941, 104
        %v1535 = vpop.permute.xlu0 %1534
        %1536 = vrot.lane.b32.xlu0 %v942, 104
        %v1537 = vpop.permute.xlu0 %1536
        %1538 = vrot.lane.b32.xlu0 %v943, 104
        %v1539 = vpop.permute.xlu0 %1538
        %1540 = vrot.lane.b32.xlu0 %v944, 104
        %v1541 = vpop.permute.xlu0 %1540
        %1542 = vrot.lane.b32.xlu0 %v945, 104
        %v1543 = vpop.permute.xlu0 %1542
        %1544 = vrot.lane.b32.xlu0 %v946, 104
        %v1545 = vpop.permute.xlu0 %1544
        %1554 = vmatprep.subr.bf16.mxu0 0
        %1555 = vmatpush1.bf16.msra.mxu0 %v1531
        %1556 = vmatprep.subr.bf16.mxu0 0
        %1557 = vmatpush1.bf16.msra.mxu0 %v1533
        %1558 = vmatprep.subr.bf16.mxu0 0
        %1559 = vmatpush1.bf16.msra.mxu0 %v1535
        %1560 = vmatprep.subr.bf16.mxu0 0
        %1561 = vmatpush1.bf16.msra.mxu0 %v1537
        %1562 = vmatprep.subr.bf16.mxu0 0
        %1563 = vmatpush1.bf16.msra.mxu0 %v1539
        %1564 = vmatprep.subr.bf16.mxu0 0
        %1565 = vmatpush1.bf16.msra.mxu0 %v1541
        %1566 = vmatprep.subr.bf16.mxu0 0
        %1567 = vmatpush1.bf16.msra.mxu0 %v1543
        %1568 = vmatprep.subr.bf16.mxu0 0
        %1569 = vmatpush1.bf16.msra.mxu0 %v1545
        %1570 = vmatprep.subr.bf16.mxu0 0
        %1571 = vmatpush1.bf16.msra.mxu0 0
        %1572 = vmatprep.subr.bf16.mxu0 0
        %1573 = vmatpush1.bf16.msra.mxu0 0
        %1574 = vmatprep.subr.bf16.mxu0 0
        %1575 = vmatpush1.bf16.msra.mxu0 0
        %1576 = vmatprep.subr.bf16.mxu0 0
        %1577 = vmatpush1.bf16.msra.mxu0 0
        %1578 = vmatprep.subr.bf16.mxu0 0
        %1579 = vmatpush1.bf16.msra.mxu0 0
        %1580 = vmatprep.subr.bf16.mxu0 0
        %1581 = vmatpush1.bf16.msra.mxu0 0
        %1582 = vmatprep.subr.bf16.mxu0 0
        %1583 = vmatpush1.bf16.msra.mxu0 0
        %1584 = vmatprep.subr.bf16.mxu0 0
        %1585 = vmatpush1.bf16.msra.mxu0 0
        %1586 = vmatprep.mubr.bf16.mxu0 0
        %1587 = vmatmul.mubr.bf16.gmra.mrb[0].mxu0 %v1529
        %v1588 = vpop.f32.mrb[0].mxu0
        %v1589 = vadd.f32 0.0, %v1588
        %v1590 = vpop.f32.mrb[0].mxu0
        %v1591 = vpop.f32.mrb[0].mxu0
        %v1592 = vpop.f32.mrb[0].mxu0
        %1593 = vdwg.mxu0
        %v1594 = vpack.c.bf16 %v1589, %v1589
        %v1596 = vunpack.c.l.b16 %v1594
        %v1597 = vpack.c.b16 %v1596, %v1596
        %1598 = vrot.lane.b32.xlu0 %v1597, 24
        %v1599 = vpop.permute.xlu0 %1598
        %vm1601 = vcmask 257216
        %1602 = vst.msk [vmem:[#allocation4] sm:$0xf] %vm1601, %v1599
        %v1603 = vld [vmem:[%s469] sm:$0xff]
        %v1604 = vmul.f32 %v1603, 0.25
        %1605 = vst [vmem:[%s469] sm:$0xff] %v1604
        %v1606 = vld [vmem:[#allocation4] sm:$0xf]
        %v1607 = vld [vmem:[%s6] sm:$0xf]
        %v1608 = vld [vmem:[%s6 + $0x4] sm:$0xf]
        %v1609 = vld [vmem:[%s6 + $0x8] sm:$0xf]
        %v1610 = vld [vmem:[%s6 + $0xc] sm:$0xf]
        %v1611 = vld [vmem:[%s10] sm:$0x1]
        %v1613 = vlaneseq
        %v1614 = vshrl.u32 %v1613, 7
        %v1615 = vsub.s32 0, %v1614
        %v1616 = vrot.slane %v1611, %v1615
        %v1622 = vunpack.c.l.b16 %v1607
        %v1623 = vunpack.c.l.b16 %v1608
        %v1624 = vunpack.c.l.b16 %v1609
        %v1625 = vunpack.c.l.b16 %v1610
        %v1626 = vpack.c.b16 %v1623, %v1622
        %v1627 = vpack.c.b16 %v1625, %v1624
        %v1631 = vsel %vm886, %v1606, 0
        %1633 = vmatprep.subr.bf16.mxu0 0
        %1634 = vmatpush1.bf16.msra.mxu0 %v1626
        %1635 = vmatprep.subr.bf16.mxu0 0
        %1636 = vmatpush1.bf16.msra.mxu0 %v1627
        %1637 = vmatprep.subr.bf16.mxu0 0
        %1638 = vmatpush1.bf16.msra.mxu0 0
        %1639 = vmatprep.subr.bf16.mxu0 0
        %1640 = vmatpush1.bf16.msra.mxu0 0
        %1641 = vmatprep.subr.bf16.mxu0 0
        %1642 = vmatpush1.bf16.msra.mxu0 0
        %1643 = vmatprep.subr.bf16.mxu0 0
        %1644 = vmatpush1.bf16.msra.mxu0 0
        %1645 = vmatprep.subr.bf16.mxu0 0
        %1646 = vmatpush1.bf16.msra.mxu0 0
        %1647 = vmatprep.subr.bf16.mxu0 0
        %1648 = vmatpush1.bf16.msra.mxu0 0
        %1649 = vmatprep.subr.bf16.mxu0 0
        %1650 = vmatpush1.bf16.msra.mxu0 0
        %1651 = vmatprep.subr.bf16.mxu0 0
        %1652 = vmatpush1.bf16.msra.mxu0 0
        %1653 = vmatprep.subr.bf16.mxu0 0
        %1654 = vmatpush1.bf16.msra.mxu0 0
        %1655 = vmatprep.subr.bf16.mxu0 0
        %1656 = vmatpush1.bf16.msra.mxu0 0
        %1657 = vmatprep.subr.bf16.mxu0 0
        %1658 = vmatpush1.bf16.msra.mxu0 0
        %1659 = vmatprep.subr.bf16.mxu0 0
        %1660 = vmatpush1.bf16.msra.mxu0 0
        %1661 = vmatprep.subr.bf16.mxu0 0
        %1662 = vmatpush1.bf16.msra.mxu0 0
        %1663 = vmatprep.subr.bf16.mxu0 0
        %1664 = vmatpush1.bf16.msra.mxu0 0
        %1665 = vmatprep.mubr.bf16.mxu0 0
        %1666 = vmatmul.mubr.bf16.gmra.mrb[0].mxu0 %v1631
        %v1667 = vpop.f32.mrb[0].mxu0
        %v1668 = vadd.f32 %v1616, %v1667
        %v1669 = vpop.f32.mrb[0].mxu0
        %v1670 = vpop.f32.mrb[0].mxu0
        %v1671 = vpop.f32.mrb[0].mxu0
        %1672 = vdwg.mxu0
        %1673 = vst.msk [vmem:[%s462] sm:$0xff] %vm886, %v1668
        %s1674 = sand.u32 %s300, 1
        %s1675 = scalar_lea.sflag [#allocation6], %s1674
        %s1676 = sand.u32 %s300, 1
        %s1677 = smul.addr %s1676, 8
        %s1678 = scalar_lea.vmem [#allocation5], %s1677
        %s1679 = sand.u32 %s328, 1
        %s1680 = scalar_lea.sflag [#allocation8], %s1679
        %s1681 = sand.u32 %s328, 1
        %s1682 = smul.addr %s1681, 8
        %s1683 = scalar_lea.vmem [#allocation7], %s1682
        // Predicated region
        $region69: #{tpu_custom_call.1} parent=63 // pred_check
          %p1684 = pneg %p310
        $region70: #{tpu_custom_call.1} parent=63 // pred_check_branch
          %1686 = sbr.rel (%p1684) target = $region72
        $region71: #{tpu_custom_call.1} parent=63 // pred_region
          %s1688 = ssub.s32 128, 128
          %1689 = vsyncadd %s1675, %s1688
          %s1690 = sadd.s32 %s35, %s34
          %s1691 = smul.addr %s1690, 128
          %s1692 = scalar_lea.hbm %s11, %s1691
          %s1694 = sshll.u32 %s1678, 4
          %s1695 = int_to_ptr.vmem [resolvable:$true] %s1694
          %1697 = dma.vmem_to_hbm [thread:$0]  %s1695, 128, %s1692, %s1675
        $region72: #{tpu_custom_call.1} parent=63 // pred_fallthru
          _
        // Predicated region
        $region73: #{tpu_custom_call.1} parent=63 // pred_check
          %p1698 = pneg %p338
        $region74: #{tpu_custom_call.1} parent=63 // pred_check_branch
          %1700 = sbr.rel (%p1698) target = $region76
        $region75: #{tpu_custom_call.1} parent=63 // pred_region
          %s1702 = ssub.s32 128, 128
          %1703 = vsyncadd %s1680, %s1702
          %s1704 = sadd.s32 %s35, %s34
          %s1705 = smul.addr %s1704, 128
          %s1706 = scalar_lea.hbm %s12, %s1705
          %s1708 = sshll.u32 %s1683, 4
          %s1709 = int_to_ptr.vmem [resolvable:$true] %s1708
          %1711 = dma.vmem_to_hbm [thread:$0]  %s1709, 128, %s1706, %s1680
        $region76: #{tpu_custom_call.1} parent=63 // pred_fallthru
          _
      $region64: #{tpu_custom_call.1} parent=5 // pred_fallthru
        _
      %p1712 = scmp.le.s32.totalorder 2, %s25
      // Predicated region
      $region77: #{tpu_custom_call.1} parent=5 // pred_check
        %p1713 = pneg %p1712
      $region78: #{tpu_custom_call.1} parent=5 // pred_check_branch
        %1715 = sbr.rel (%p1713) target = $region80
      $region79: #{tpu_custom_call.1} parent=5 // pred_region
        %s1716 = ssub.s32 %s25, 2
        // Predicated region
        $region81: #{tpu_custom_call.1} parent=79 // pred_check
          %p1717 = pneg %p316
        $region82: #{tpu_custom_call.1} parent=79 // pred_check_branch
          %1719 = sbr.rel (%p1717) target = $region84
        $region83: #{tpu_custom_call.1} parent=79 // pred_region
          %s1720 = sand.u32 %s301, 1
          %s1721 = scalar_lea.sflag [#allocation6], %s1720
          %s1722 = sand.u32 %s301, 1
          %s1723 = smul.addr %s1722, 8
          %s1724 = scalar_lea.vmem [#allocation5], %s1723
          %1725 = dma.done %s1721, 128
        $region84: #{tpu_custom_call.1} parent=79 // pred_fallthru
          _
        // Predicated region
        $region85: #{tpu_custom_call.1} parent=79 // pred_check
          %p1726 = pneg %p344
        $region86: #{tpu_custom_call.1} parent=79 // pred_check_branch
          %1728 = sbr.rel (%p1726) target = $region88
        $region87: #{tpu_custom_call.1} parent=79 // pred_region
          %s1729 = sand.u32 %s329, 1
          %s1730 = scalar_lea.sflag [#allocation8], %s1729
          %s1731 = sand.u32 %s329, 1
          %s1732 = smul.addr %s1731, 8
          %s1733 = scalar_lea.vmem [#allocation7], %s1732
          %1734 = dma.done %s1730, 128
        $region88: #{tpu_custom_call.1} parent=79 // pred_fallthru
          _
      $region80: #{tpu_custom_call.1} parent=5 // pred_fallthru
        _
    $region6: #{tpu_custom_call.1} parent=1 // loop_footer
      %s29 = sadd.s32 1, %s25
    $region7: #{tpu_custom_call.1} parent=1 // loop_footer_branch
      %24 = sbr.rel target = $region3
    $region8: #{tpu_custom_call.1} parent=1 // loop_exit
      _
    %1735 = vsyncpa [#allocation6], 1
    %s1736 = scalar_lea.sflag [#allocation6], 1
    %1737 = vsyncpa %s1736, 1
    %1738 = vsyncpa [#allocation8], 1
    %s1739 = scalar_lea.sflag [#allocation8], 1
    %1740 = vsyncpa %s1739, 1

</llo_original>
